<compile_context>
chip_gen: v7x
topology: tpu7x:2x2x1
jax: 0.10.0
libtpu: 0.0.40
codegen_flags: <defaults>
</compile_context>

<pallas_src>
import math

import jax
import jax.numpy as jnp
from jax.experimental import pallas as pl
from jax.experimental.pallas import tpu as pltpu

_LANE = 128
_TILE_CAP = 512            # cap for tm / tn / tk (multiple of 256 and 128)
_SMALL_PROBLEM = 1 << 18   # M*N*K at or below this -> plain XLA dot fast path


def _round_up(x, m):
    return ((x + m - 1) // m) * m


def _pick_tile(dim, cap, align):
    """Full-extent block if it fits under `cap`, else a balanced `align`-aligned
    tile <= cap (minimises ragged-tail / pad waste vs. always using `cap`)."""
    if dim <= cap:
        return dim
    nblocks = pl.cdiv(dim, cap)
    return _round_up(pl.cdiv(dim, nblocks), align)


def _matmul_nt(x, w):
    """x:(M,K) contracted with w:(N,K) on the last axis of both -> (M,N).

    This is exactly x @ w.T, but the transpose is absorbed by the MXU."""
    return jax.lax.dot_general(
        x, w,
        dimension_numbers=(((1,), (1,)), ((), ())),
        preferred_element_type=jnp.float32,
    )


def _linear_kernel_inplace(x_ref, w_ref, o_ref):
    """f32 output: accumulate directly into the resident output block."""
    @pl.when(pl.program_id(2) == 0)
    def _():
        o_ref[...] = jnp.zeros_like(o_ref)

    o_ref[...] += _matmul_nt(x_ref[...], w_ref[...])


def _linear_kernel_acc(x_ref, w_ref, o_ref, acc_ref):
    """Non-f32 output: accumulate in an f32 scratch, cast on the last K step."""
    k = pl.program_id(2)

    @pl.when(k == 0)
    def _():
        acc_ref[...] = jnp.zeros_like(acc_ref)

    acc_ref[...] += _matmul_nt(x_ref[...], w_ref[...])

    @pl.when(k == pl.num_programs(2) - 1)
    def _():
        o_ref[...] = acc_ref[...].astype(o_ref.dtype)


def _linear_pallas(x2d, w, *, tm, tn, tk):
    """o = x2d @ w.T with x2d:(M,K), w:(N,K), already padded / tile-friendly."""
    M, K = x2d.shape
    N, Kw = w.shape
    assert K == Kw

    out_dtype = x2d.dtype
    direct = out_dtype == jnp.float32
    kernel = _linear_kernel_inplace if direct else _linear_kernel_acc
    scratch = [] if direct else [pltpu.VMEM((tm, tn), jnp.float32)]

    grid = (pl.cdiv(M, tm), pl.cdiv(N, tn), pl.cdiv(K, tk))

    cost = pl.CostEstimate(
        flops=2 * M * N * K,
        transcendentals=0,
        bytes_accessed=(M * K + N * K) * x2d.dtype.itemsize
        + M * N * jnp.dtype(out_dtype).itemsize,
    )

    return pl.pallas_call(
        kernel,
        out_shape=jax.ShapeDtypeStruct((M, N), out_dtype),
        grid_spec=pltpu.PrefetchScalarGridSpec(
            num_scalar_prefetch=0,
            grid=grid,
            in_specs=[
                pl.BlockSpec((tm, tk), lambda i, j, k: (i, k)),
                # Weight stays in its PyTorch (N, K) layout; contracted on K.
                pl.BlockSpec((tn, tk), lambda i, j, k: (j, k)),
            ],
            out_specs=pl.BlockSpec((tm, tn), lambda i, j, k: (i, j)),
            scratch_shapes=scratch,
        ),
        compiler_params=pltpu.CompilerParams(
            # M/N blocks shard across TensorCores (megacore / v7x 2 TCs);
            # K is the sequential reduction axis (output block stays resident).
            dimension_semantics=("parallel", "parallel", "arbitrary"),
        ),
        cost_estimate=cost,
    )(x2d, w)


def prediction_layer_forward(x, weight, *, force_pallas=False):
    """Equivalent of PredictionLayer.forward (bias-free Linear).

    x:      (..., input_size)
    weight: (output_size, input_size)   -- PyTorch nn.Linear layout
    returns (..., output_size)
    """
    K = x.shape[-1]
    N, Kw = weight.shape
    assert K == Kw, "input_size mismatch between x and weight"
    lead = x.shape[:-1]
    M = 1
    for d in lead:
        M *= int(d)

    x2d = x.reshape((M, K))

    # Small-problem fast path: custom-call + per-grid-step overhead dwarfs the
    # matmul itself at tiny shapes on every TPU generation.
    if not force_pallas and M * N * K <= _SMALL_PROBLEM:
        out2d = _matmul_nt(x2d, weight).astype(x.dtype)
        return out2d.reshape(lead + (N,))

    # --- Tile selection ------------------------------------------------------
    # K (reduction): full-extent block if small, else a 128-aligned tile with
    # K zero-padded to an exact multiple of tk (ragged-K correctness fix).
    if K <= _TILE_CAP:
        tk, Kp = K, K
    else:
        tk = _pick_tile(_round_up(K, _LANE), _TILE_CAP, _LANE)
        Kp = _round_up(K, tk)

    # N (output lane axis): pad to a multiple of 128 so the writeback is
    # lane-dense; padded weight rows are zero -> padded output cols are zero.
    Np = _round_up(N, _LANE)
    tn = Np if Np <= _TILE_CAP else _pick_tile(Np, _TILE_CAP, _LANE)

    # M (sublane axis): only needs 8-alignment when tiled; ragged tail is fine.
    tm = _pick_tile(M, _TILE_CAP, 8)

    if Kp != K:
        x2d = jnp.pad(x2d, ((0, 0), (0, Kp - K)))
    w = weight
    if Np != N or Kp != K:
        w = jnp.pad(weight, ((0, Np - N), (0, Kp - K)))

    out2d = _linear_pallas(x2d, w, tm=tm, tn=tn, tk=tk)
    if Np != N:
        out2d = out2d[:, :N]
    return out2d.reshape(lead + (N,))


if __name__ == "__main__":
    key = jax.random.PRNGKey(0)
    k_x1, k_w1, k_x2, k_w2 = jax.random.split(key, 4)

    # --- Case 1: small shapes typical of the module (fast path). -------------
    batch, seq, input_size, output_size = 2, 8, 32, 16
    x1 = jax.random.normal(k_x1, (batch, seq, input_size), dtype=jnp.float32)
    bound1 = 1.0 / math.sqrt(input_size)
    w1 = jax.random.uniform(k_w1, (output_size, input_size),
                            minval=-bound1, maxval=bound1, dtype=jnp.float32)
    out1 = prediction_layer_forward(x1, w1)
    jax.block_until_ready(out1)
    ref1 = jnp.einsum("bsi,oi->bso", x1, w1)
    assert out1.shape == (batch, seq, output_size)
    assert jnp.allclose(out1, ref1, atol=1e-5, rtol=1e-5)

    # --- Case 2: exercises the Pallas kernel (tiled M, padded N and K). ------
    b2, s2, in2, out2 = 8, 80, 600, 160   # M=640 (tiled), K=600 (padded), N=160 (pad->256)
    x2 = jax.random.normal(k_x2, (b2, s2, in2), dtype=jnp.float32)
    bound2 = 1.0 / math.sqrt(in2)
    w2 = jax.random.uniform(k_w2, (out2, in2),
                            minval=-bound2, maxval=bound2, dtype=jnp.float32)
    out_big = prediction_layer_forward(x2, w2, force_pallas=True)
    jax.block_until_ready(out_big)
    ref2 = jnp.einsum("bsi,oi->bso", x2, w2)
    assert out_big.shape == (b2, s2, out2)
    assert jnp.allclose(out_big, ref2, atol=2e-2, rtol=2e-2), (
        "max abs err: " + str(float(jnp.max(jnp.abs(out_big - ref2)))))

    print("KERNEL_OK")
</pallas_src>

<mosaic_0001>
module attributes {stable_mosaic.version = 11 : i64} {
  func.func @_linear_kernel_inplace(%arg0: i32, %arg1: i32, %arg2: i32, %arg3: memref<320x384xf32, #tpu.memory_space<vmem>>, %arg4: memref<256x384xf32, #tpu.memory_space<vmem>>, %arg5: memref<320x256xf32, #tpu.memory_space<vmem>>) attributes {dimension_semantics = [#tpu.dimension_semantics<parallel>, #tpu.dimension_semantics<parallel>, #tpu.dimension_semantics<arbitrary>], iteration_bounds = array<i64: 2, 1, 2>, scalar_prefetch = 0 : i64, scratch_operands = 0 : i64, tpu.core_type = #tpu.core_type<tc>, window_params = [{transform_indices = @transform_0, window_bounds = array<i64: 320, 384>}, {transform_indices = @transform_1, window_bounds = array<i64: 256, 384>}, {transform_indices = @transform_2, window_bounds = array<i64: 320, 256>}]} {
    %c0_i32 = arith.constant 0 : i32
    %0 = arith.cmpi eq, %arg2, %c0_i32 : i32
    %1 = arith.extui %0 : i1 to i32
    %c0_i32_0 = arith.constant 0 : i32
    %2 = arith.cmpi ne, %1, %c0_i32_0 : i32
    scf.if %2 {
      %cst_8 = arith.constant 0.000000e+00 : f32
      %9 = vector.broadcast %cst_8 : f32 to vector<320x256xf32>
      %c0_9 = arith.constant 0 : index
      %c0_10 = arith.constant 0 : index
      %10 = vector.load %arg5[%c0_9, %c0_10] : memref<320x256xf32, #tpu.memory_space<vmem>>, vector<320x256xf32>
      tpu.vector_store %arg5[%c0_9, %c0_10], %9 {strides = array<i32>} : memref<320x256xf32, #tpu.memory_space<vmem>>, vector<320x256xf32>,
    } else {
    }
    %c0 = arith.constant 0 : index
    %c0_1 = arith.constant 0 : index
    %3 = vector.load %arg5[%c0, %c0_1] : memref<320x256xf32, #tpu.memory_space<vmem>>, vector<320x256xf32>
    %c0_2 = arith.constant 0 : index
    %c0_3 = arith.constant 0 : index
    %4 = vector.load %arg3[%c0_2, %c0_3] : memref<320x384xf32, #tpu.memory_space<vmem>>, vector<320x384xf32>
    %c0_4 = arith.constant 0 : index
    %c0_5 = arith.constant 0 : index
    %5 = vector.load %arg4[%c0_4, %c0_5] : memref<256x384xf32, #tpu.memory_space<vmem>>, vector<256x384xf32>
    %cst = arith.constant dense<0.000000e+00> : vector<320x256xf32>
    %6 = tpu.matmul %4, %5, %cst {dimension_numbers = #tpu.dot_dimension_numbers<[1], [1], [0], [0], [0, 0, 1, 0], [], []>} : vector<320x384xf32>, vector<256x384xf32>, vector<320x256xf32> -> vector<320x256xf32>
    %7 = arith.addf %3, %6 : vector<320x256xf32>
    %c0_6 = arith.constant 0 : index
    %c0_7 = arith.constant 0 : index
    %8 = vector.load %arg5[%c0_6, %c0_7] : memref<320x256xf32, #tpu.memory_space<vmem>>, vector<320x256xf32>
    tpu.vector_store %arg5[%c0_6, %c0_7], %7 {strides = array<i32>} : memref<320x256xf32, #tpu.memory_space<vmem>>, vector<320x256xf32>,
    return
  }
  func.func @transform_0(%arg0: i32, %arg1: i32, %arg2: i32) -> (i32, i32) {
    %c0_i32 = arith.constant 0 : i32
    return %arg0, %arg2 : i32, i32
  }
  func.func @transform_1(%arg0: i32, %arg1: i32, %arg2: i32) -> (i32, i32) {
    %c0_i32 = arith.constant 0 : i32
    return %arg1, %arg2 : i32, i32
  }
  func.func @transform_2(%arg0: i32, %arg1: i32, %arg2: i32) -> (i32, i32) {
    %c0_i32 = arith.constant 0 : i32
    return %arg0, %arg1 : i32, i32
  }
}

</mosaic_0001>

<llo_original>
// kernel: tpu_custom_call.1
$region0: #{tpu_custom_call.1}
  #allocation0 [shape = 'u32[]', space=smem, size = 0x4, offset = 0x4, fixed_abs, tag = 'smem constant byte address 0x4 - core index']
  #allocation1 [shape = 'u32[144,128]{1,0:T(1,128)}', space=vmem, size = 0x12000, scoped, tag = 'internal scratch']
  %s0 = inlined_call_operand.hbm [shape: f32[640,768], index: 0, kind: input, shape index: {}]
  %s1 = inlined_call_operand.hbm [shape: f32[256,768], index: 1, kind: input, shape index: {}]
  %s2 = inlined_call_operand.hbm [shape: f32[640,256], index: 2, kind: output, shape index: {}]
  %s3 = sld [smem:[#allocation0]]
  $region53: #{tpu_custom_call.1} parent=0
    _
  %s5 = ssub.s32 1, %s3
  %s6 = scalar_select 0, %s5, %s3
  $region1: #{tpu_custom_call.1} parent=0
    #allocation2 [shape = 'u8[983040]{0}', space=vmem, size = 0xf0000, scoped, tag = 'input window, operand 0']
    #allocation3 [shape = 's32[2]{0}', space=sflag, size = 0x8, scoped, tag = 'scoped memory for tpu_custom_call.1']
    #allocation4 [shape = 's32[2]{0}', space=sflag, size = 0x8, scoped, tag = 'scoped memory for tpu_custom_call.1']
    #allocation5 [shape = 'u8[786432]{0}', space=vmem, size = 0xc0000, scoped, tag = 'input window, operand 1']
    #allocation6 [shape = 's32[2]{0}', space=sflag, size = 0x8, scoped, tag = 'scoped memory for tpu_custom_call.1']
    #allocation7 [shape = 'u8[655360]{0}', space=vmem, size = 0xa0000, scoped, tag = 'output window, operand 0']
    %7 = vsyncpa [#allocation3], 0
    %s8 = scalar_lea.sflag [#allocation3], 1
    %9 = vsyncpa %s8, 0
    %10 = vsyncpa [#allocation6], 0
    %s11 = scalar_lea.sflag [#allocation6], 1
    %12 = vsyncpa %s11, 0
    %13 = vsyncpa [#allocation4], 0
    %s14 = scalar_lea.sflag [#allocation4], 1
    %15 = vsyncpa %s14, 0
    loop: start=0, step=1, limit=6
    $region2: #{tpu_custom_call.1} parent=1 // loop_pre_header
      _
    $region3: #{tpu_custom_call.1} parent=1 // loop_header
      %s17 = sphi 0, %s21
      %p18 = scmp.ge.s32.totalorder %s17, 6
      %s24 = sphi 0, %s43
      %s25 = sphi 0, %s39
      %s26 = sphi 0, %s35
      %s27 = sphi 0, %s24
      %s28 = sphi 0, %s25
      %s29 = sphi 0, %s26
      %s30 = sphi 0, %s27
      %s31 = sphi 0, %s28
      %s32 = sphi 0, %s29
      %s48 = sphi 0, %s50
      %s51 = sphi 0, %s48
      %s52 = sphi 0, %s51
      %s68 = sphi 0, %s52
      %s76 = sphi 0, %s78
      %s79 = sphi 0, %s76
      %s80 = sphi 0, %s79
      %s96 = sphi 0, %s80
      %s104 = sphi 0, %s106
      %s107 = sphi 0, %s104
      %s108 = sphi 0, %s107
      %s124 = sphi 0, %s108
    $region4: #{tpu_custom_call.1} parent=1 // loop_header_branch
      %20 = sbr.rel (%p18) target = $region8
    $region5: #{tpu_custom_call.1} parent=1 // loop_body
      %s22 = ssub.s32 %s17, 1
      %s23 = ssub.s32 %s17, 2
      %s33 = sadd.s32 1, %s26
      %p34 = scmp.ge.s32.totalorder %s33, 2
      %s35 = scalar_select %p34, 0, %s33
      %s36 = sadd.s32 1, %s25
      %s37 = scalar_select %p34, %s36, %s25
      %p38 = scmp.ge.s32.totalorder %s37, 1
      %s39 = scalar_select %p38, 0, %s37
      %s40 = sadd.s32 1, %s24
      %s41 = scalar_select %p38, %s40, %s24
      %p42 = scmp.ge.s32.totalorder %s41, 2
      %s43 = scalar_select %p42, 0, %s41
      %s44 = ssub.s32 %s24, %s43
      %s45 = ssub.s32 %s26, %s35
      %s46 = sor.u32 %s44, %s45
      %p47 = scmp.eq.s32.totalorder %s46, 0
      %s49 = sadd.s32 %s48, 1
      %s50 = scalar_select %p47, %s48, %s49
      %p53 = pneg %p47
      %p54 = scmp.eq.s32.totalorder %s17, 3
      %p55 = por %p53, %p54
      %p56 = scmp.ne.s32.totalorder %s48, %s51
      %p57 = scmp.eq.s32.totalorder %s17, 0
      %p58 = por %p56, %p57
      %p59 = scmp.ne.s32.totalorder %s48, %s51
      %p60 = scmp.eq.s32.totalorder %s22, 3
      %p61 = por %p59, %p60
      %p62 = scmp.ne.s32.totalorder %s51, %s52
      %p63 = scmp.eq.s32.totalorder %s22, 0
      %p64 = por %p62, %p63
      %p65 = scmp.ne.s32.totalorder %s51, %s52
      %p66 = scmp.eq.s32.totalorder %s23, 3
      %p67 = por %p65, %p66
      %p69 = scmp.ne.s32.totalorder %s52, %s68
      %p70 = scmp.eq.s32.totalorder %s23, 0
      %p71 = por %p69, %p70
      %s72 = ssub.s32 %s25, %s39
      %s73 = ssub.s32 %s26, %s35
      %s74 = sor.u32 %s72, %s73
      %p75 = scmp.eq.s32.totalorder %s74, 0
      %s77 = sadd.s32 %s76, 1
      %s78 = scalar_select %p75, %s76, %s77
      %p81 = pneg %p75
      %p82 = scmp.eq.s32.totalorder %s17, 3
      %p83 = por %p81, %p82
      %p84 = scmp.ne.s32.totalorder %s76, %s79
      %p85 = scmp.eq.s32.totalorder %s17, 0
      %p86 = por %p84, %p85
      %p87 = scmp.ne.s32.totalorder %s76, %s79
      %p88 = scmp.eq.s32.totalorder %s22, 3
      %p89 = por %p87, %p88
      %p90 = scmp.ne.s32.totalorder %s79, %s80
      %p91 = scmp.eq.s32.totalorder %s22, 0
      %p92 = por %p90, %p91
      %p93 = scmp.ne.s32.totalorder %s79, %s80
      %p94 = scmp.eq.s32.totalorder %s23, 3
      %p95 = por %p93, %p94
      %p97 = scmp.ne.s32.totalorder %s80, %s96
      %p98 = scmp.eq.s32.totalorder %s23, 0
      %p99 = por %p97, %p98
      %s100 = ssub.s32 %s24, %s43
      %s101 = ssub.s32 %s25, %s39
      %s102 = sor.u32 %s100, %s101
      %p103 = scmp.eq.s32.totalorder %s102, 0
      %s105 = sadd.s32 %s104, 1
      %s106 = scalar_select %p103, %s104, %s105
      %p109 = pneg %p103
      %p110 = scmp.eq.s32.totalorder %s17, 3
      %p111 = por %p109, %p110
      %p112 = scmp.ne.s32.totalorder %s104, %s107
      %p113 = scmp.eq.s32.totalorder %s17, 0
      %p114 = por %p112, %p113
      %p115 = scmp.ne.s32.totalorder %s104, %s107
      %p116 = scmp.eq.s32.totalorder %s22, 3
      %p117 = por %p115, %p116
      %p118 = scmp.ne.s32.totalorder %s107, %s108
      %p119 = scmp.eq.s32.totalorder %s22, 0
      %p120 = por %p118, %p119
      %p121 = scmp.ne.s32.totalorder %s107, %s108
      %p122 = scmp.eq.s32.totalorder %s23, 3
      %p123 = por %p121, %p122
      %p125 = scmp.ne.s32.totalorder %s108, %s124
      %p126 = scmp.eq.s32.totalorder %s23, 0
      %p127 = por %p125, %p126
      %p128 = scmp.le.s32.totalorder 1, %s17
      %p129 = scmp.lt.s32.totalorder %s17, 5
      %p130 = pnand %p128, %p129
      %p131 = pneg %p130
      // Predicated region
      $region9: #{tpu_custom_call.1} parent=5 // pred_check
        _
      $region10: #{tpu_custom_call.1} parent=5 // pred_check_branch
        %133 = sbr.rel (%p130) target = $region12
      $region11: #{tpu_custom_call.1} parent=5 // pred_region
        %s134 = ssub.s32 %s17, 1
      $region12: #{tpu_custom_call.1} parent=5 // pred_fallthru
        _
      %p135 = scmp.lt.s32.totalorder %s17, 4
      // Predicated region
      $region13: #{tpu_custom_call.1} parent=5 // pred_check
        %p136 = pneg %p135
      $region14: #{tpu_custom_call.1} parent=5 // pred_check_branch
        %138 = sbr.rel (%p136) target = $region16
      $region15: #{tpu_custom_call.1} parent=5 // pred_region
        // Predicated region
        $region17: #{tpu_custom_call.1} parent=15 // pred_check
          %p139 = pneg %p58
        $region18: #{tpu_custom_call.1} parent=15 // pred_check_branch
          %141 = sbr.rel (%p139) target = $region20
        $region19: #{tpu_custom_call.1} parent=15 // pred_region
          %s142 = sand.u32 %s48, 1
          %s143 = scalar_lea.sflag [#allocation3], %s142
          %s144 = sand.u32 %s48, 1
          %s145 = smul.addr %s144, 960
          %s146 = scalar_lea.vmem [#allocation2], %s145
          %s147 = smul.u32 40, %s24
          %s148 = smul.u32 3, %s26
          %s150 = ssub.s32 15360, 15360
          %151 = vsyncadd %s143, %s150
          %s152 = smul.addr %s147, 6
          %s153 = sadd.s32 %s148, %s152
          %s154 = smul.addr %s153, 128
          %s155 = scalar_lea.hbm %s0, %s154
          %s156 = sshll.u32 %s146, 4
          %s157 = int_to_ptr.vmem [resolvable:$true] %s156
          %162 = dma.hbm_to_vmem [thread:$0]  %s155, 15360, %s157, %s143, 768, 384, 24
        $region20: #{tpu_custom_call.1} parent=15 // pred_fallthru
          _
        // Predicated region
        $region21: #{tpu_custom_call.1} parent=15 // pred_check
          %p163 = pneg %p86
        $region22: #{tpu_custom_call.1} parent=15 // pred_check_branch
          %165 = sbr.rel (%p163) target = $region24
        $region23: #{tpu_custom_call.1} parent=15 // pred_region
          %s166 = sand.u32 %s76, 1
          %s167 = scalar_lea.sflag [#allocation6], %s166
          %s168 = sand.u32 %s76, 1
          %s169 = smul.addr %s168, 768
          %s170 = scalar_lea.vmem [#allocation5], %s169
          %s171 = smul.u32 32, %s25
          %s172 = smul.u32 3, %s26
          %s174 = ssub.s32 12288, 12288
          %175 = vsyncadd %s167, %s174
          %s176 = smul.addr %s171, 6
          %s177 = sadd.s32 %s172, %s176
          %s178 = smul.addr %s177, 128
          %s179 = scalar_lea.hbm %s1, %s178
          %s180 = sshll.u32 %s170, 4
          %s181 = int_to_ptr.vmem [resolvable:$true] %s180
          %186 = dma.hbm_to_vmem [thread:$0]  %s179, 12288, %s181, %s167, 768, 384, 24
        $region24: #{tpu_custom_call.1} parent=15 // pred_fallthru
          _
      $region16: #{tpu_custom_call.1} parent=5 // pred_fallthru
        _
      %p187 = scmp.le.s32.totalorder 1, %s17
      %p188 = scmp.lt.s32.totalorder %s17, 5
      %p189 = pnand %p187, %p188
      %p190 = pneg %p189
      // Predicated region
      $region25: #{tpu_custom_call.1} parent=5 // pred_check
        _
      $region26: #{tpu_custom_call.1} parent=5 // pred_check_branch
        %192 = sbr.rel (%p189) target = $region28
      $region27: #{tpu_custom_call.1} parent=5 // pred_region
        %s193 = ssub.s32 %s17, 1
        %s194 = sand.u32 %s51, 1
        %s195 = scalar_lea.sflag [#allocation3], %s194
        %s196 = sand.u32 %s51, 1
        %s197 = smul.addr %s196, 960
        %s198 = scalar_lea.vmem [#allocation2], %s197
        // Predicated region
        $region29: #{tpu_custom_call.1} parent=27 // pred_check
          %p199 = pneg %p64
        $region30: #{tpu_custom_call.1} parent=27 // pred_check_branch
          %201 = sbr.rel (%p199) target = $region32
        $region31: #{tpu_custom_call.1} parent=27 // pred_region
          %202 = dma.done %s195, 15360
        $region32: #{tpu_custom_call.1} parent=27 // pred_fallthru
          _
        %s203 = sand.u32 %s79, 1
        %s204 = scalar_lea.sflag [#allocation6], %s203
        %s205 = sand.u32 %s79, 1
        %s206 = smul.addr %s205, 768
        %s207 = scalar_lea.vmem [#allocation5], %s206
        // Predicated region
        $region33: #{tpu_custom_call.1} parent=27 // pred_check
          %p208 = pneg %p92
        $region34: #{tpu_custom_call.1} parent=27 // pred_check_branch
          %210 = sbr.rel (%p208) target = $region36
        $region35: #{tpu_custom_call.1} parent=27 // pred_region
          %211 = dma.done %s204, 12288
        $region36: #{tpu_custom_call.1} parent=27 // pred_fallthru
          _
        %s212 = sand.u32 %s51, 1
        %s213 = scalar_lea.sflag [#allocation3], %s212
        %s214 = sand.u32 %s51, 1
        %s215 = smul.addr %s214, 960
        %s216 = scalar_lea.vmem [#allocation2], %s215
        %p217 = pneg %p64
        %p218 = pneg %p61
        %s219 = sand.u32 %s79, 1
        %s220 = scalar_lea.sflag [#allocation6], %s219
        %s221 = sand.u32 %s79, 1
        %s222 = smul.addr %s221, 768
        %s223 = scalar_lea.vmem [#allocation5], %s222
        %p224 = pneg %p92
        %p225 = pneg %p89
        %p226 = pneg %p120
        %p227 = pneg %p117
        %s228 = sand.u32 %s107, 1
        %s229 = scalar_lea.sflag [#allocation4], %s228
        %s230 = sand.u32 %s107, 1
        %s231 = smul.addr %s230, 640
        %s232 = scalar_lea.vmem [#allocation7], %s231
        %s233 = smul.u32 40, %s27
        %s234 = smul.u32 3, %s29
        %s235 = smul.u32 32, %s28
        %s236 = smul.u32 3, %s29
        %s237 = smul.u32 40, %s27
        %s238 = smul.u32 2, %s28
        %p239 = scmp.eq.s32.totalorder %s29, 0
        // Predicated region
        $region37: #{tpu_custom_call.1} parent=27 // pred_check
          %p240 = pneg %p239
        $region38: #{tpu_custom_call.1} parent=27 // pred_check_branch
          %242 = sbr.rel (%p240) target = $region40
        $region39: #{tpu_custom_call.1} parent=27 // pred_region
          %243 = vst [vmem:[%s232] sm:$0xff] 0.0
          %244 = vst [vmem:[%s232 + $0x8] sm:$0xff] 0.0
          %245 = vst [vmem:[%s232 + $0x10] sm:$0xff] 0.0
          %246 = vst [vmem:[%s232 + $0x18] sm:$0xff] 0.0
          %247 = vst [vmem:[%s232 + $0x20] sm:$0xff] 0.0
          %248 = vst [vmem:[%s232 + $0x28] sm:$0xff] 0.0
          %249 = vst [vmem:[%s232 + $0x30] sm:$0xff] 0.0
          %250 = vst [vmem:[%s232 + $0x38] sm:$0xff] 0.0
          %251 = vst [vmem:[%s232 + $0x40] sm:$0xff] 0.0
          %252 = vst [vmem:[%s232 + $0x48] sm:$0xff] 0.0
          %253 = vst [vmem:[%s232 + $0x50] sm:$0xff] 0.0
          %254 = vst [vmem:[%s232 + $0x58] sm:$0xff] 0.0
          %255 = vst [vmem:[%s232 + $0x60] sm:$0xff] 0.0
          %256 = vst [vmem:[%s232 + $0x68] sm:$0xff] 0.0
          %257 = vst [vmem:[%s232 + $0x70] sm:$0xff] 0.0
          %258 = vst [vmem:[%s232 + $0x78] sm:$0xff] 0.0
          %259 = vst [vmem:[%s232 + $0x80] sm:$0xff] 0.0
          %260 = vst [vmem:[%s232 + $0x88] sm:$0xff] 0.0
          %261 = vst [vmem:[%s232 + $0x90] sm:$0xff] 0.0
          %262 = vst [vmem:[%s232 + $0x98] sm:$0xff] 0.0
          %263 = vst [vmem:[%s232 + $0xa0] sm:$0xff] 0.0
          %264 = vst [vmem:[%s232 + $0xa8] sm:$0xff] 0.0
          %265 = vst [vmem:[%s232 + $0xb0] sm:$0xff] 0.0
          %266 = vst [vmem:[%s232 + $0xb8] sm:$0xff] 0.0
          %267 = vst [vmem:[%s232 + $0xc0] sm:$0xff] 0.0
          %268 = vst [vmem:[%s232 + $0xc8] sm:$0xff] 0.0
          %269 = vst [vmem:[%s232 + $0xd0] sm:$0xff] 0.0
          %270 = vst [vmem:[%s232 + $0xd8] sm:$0xff] 0.0
          %271 = vst [vmem:[%s232 + $0xe0] sm:$0xff] 0.0
          %272 = vst [vmem:[%s232 + $0xe8] sm:$0xff] 0.0
          %273 = vst [vmem:[%s232 + $0xf0] sm:$0xff] 0.0
          %274 = vst [vmem:[%s232 + $0xf8] sm:$0xff] 0.0
          %275 = vst [vmem:[%s232 + $0x100] sm:$0xff] 0.0
          %276 = vst [vmem:[%s232 + $0x108] sm:$0xff] 0.0
          %277 = vst [vmem:[%s232 + $0x110] sm:$0xff] 0.0
          %278 = vst [vmem:[%s232 + $0x118] sm:$0xff] 0.0
          %279 = vst [vmem:[%s232 + $0x120] sm:$0xff] 0.0
          %280 = vst [vmem:[%s232 + $0x128] sm:$0xff] 0.0
          %281 = vst [vmem:[%s232 + $0x130] sm:$0xff] 0.0
          %282 = vst [vmem:[%s232 + $0x138] sm:$0xff] 0.0
          %283 = vst [vmem:[%s232 + $0x140] sm:$0xff] 0.0
          %284 = vst [vmem:[%s232 + $0x148] sm:$0xff] 0.0
          %285 = vst [vmem:[%s232 + $0x150] sm:$0xff] 0.0
          %286 = vst [vmem:[%s232 + $0x158] sm:$0xff] 0.0
          %287 = vst [vmem:[%s232 + $0x160] sm:$0xff] 0.0
          %288 = vst [vmem:[%s232 + $0x168] sm:$0xff] 0.0
          %289 = vst [vmem:[%s232 + $0x170] sm:$0xff] 0.0
          %290 = vst [vmem:[%s232 + $0x178] sm:$0xff] 0.0
          %291 = vst [vmem:[%s232 + $0x180] sm:$0xff] 0.0
          %292 = vst [vmem:[%s232 + $0x188] sm:$0xff] 0.0
          %293 = vst [vmem:[%s232 + $0x190] sm:$0xff] 0.0
          %294 = vst [vmem:[%s232 + $0x198] sm:$0xff] 0.0
          %295 = vst [vmem:[%s232 + $0x1a0] sm:$0xff] 0.0
          %296 = vst [vmem:[%s232 + $0x1a8] sm:$0xff] 0.0
          %297 = vst [vmem:[%s232 + $0x1b0] sm:$0xff] 0.0
          %298 = vst [vmem:[%s232 + $0x1b8] sm:$0xff] 0.0
          %299 = vst [vmem:[%s232 + $0x1c0] sm:$0xff] 0.0
          %300 = vst [vmem:[%s232 + $0x1c8] sm:$0xff] 0.0
          %301 = vst [vmem:[%s232 + $0x1d0] sm:$0xff] 0.0
          %302 = vst [vmem:[%s232 + $0x1d8] sm:$0xff] 0.0
          %303 = vst [vmem:[%s232 + $0x1e0] sm:$0xff] 0.0
          %304 = vst [vmem:[%s232 + $0x1e8] sm:$0xff] 0.0
          %305 = vst [vmem:[%s232 + $0x1f0] sm:$0xff] 0.0
          %306 = vst [vmem:[%s232 + $0x1f8] sm:$0xff] 0.0
          %307 = vst [vmem:[%s232 + $0x200] sm:$0xff] 0.0
          %308 = vst [vmem:[%s232 + $0x208] sm:$0xff] 0.0
          %309 = vst [vmem:[%s232 + $0x210] sm:$0xff] 0.0
          %310 = vst [vmem:[%s232 + $0x218] sm:$0xff] 0.0
          %311 = vst [vmem:[%s232 + $0x220] sm:$0xff] 0.0
          %312 = vst [vmem:[%s232 + $0x228] sm:$0xff] 0.0
          %313 = vst [vmem:[%s232 + $0x230] sm:$0xff] 0.0
          %314 = vst [vmem:[%s232 + $0x238] sm:$0xff] 0.0
          %315 = vst [vmem:[%s232 + $0x240] sm:$0xff] 0.0
          %316 = vst [vmem:[%s232 + $0x248] sm:$0xff] 0.0
          %317 = vst [vmem:[%s232 + $0x250] sm:$0xff] 0.0
          %318 = vst [vmem:[%s232 + $0x258] sm:$0xff] 0.0
          %319 = vst [vmem:[%s232 + $0x260] sm:$0xff] 0.0
          %320 = vst [vmem:[%s232 + $0x268] sm:$0xff] 0.0
          %321 = vst [vmem:[%s232 + $0x270] sm:$0xff] 0.0
          %322 = vst [vmem:[%s232 + $0x278] sm:$0xff] 0.0
        $region40: #{tpu_custom_call.1} parent=27 // pred_fallthru
          _
        %v323 = vld [vmem:[%s232] sm:$0xff]
        %v324 = vld [vmem:[%s232 + $0x8] sm:$0xff]
        %v325 = vld [vmem:[%s232 + $0x10] sm:$0xff]
        %v326 = vld [vmem:[%s232 + $0x18] sm:$0xff]
        %v327 = vld [vmem:[%s232 + $0x20] sm:$0xff]
        %v328 = vld [vmem:[%s232 + $0x28] sm:$0xff]
        %v329 = vld [vmem:[%s232 + $0x30] sm:$0xff]
        %v330 = vld [vmem:[%s232 + $0x38] sm:$0xff]
        %v331 = vld [vmem:[%s232 + $0x40] sm:$0xff]
        %v332 = vld [vmem:[%s232 + $0x48] sm:$0xff]
        %v333 = vld [vmem:[%s232 + $0x50] sm:$0xff]
        %v334 = vld [vmem:[%s232 + $0x58] sm:$0xff]
        %v335 = vld [vmem:[%s232 + $0x60] sm:$0xff]
        %v336 = vld [vmem:[%s232 + $0x68] sm:$0xff]
        %v337 = vld [vmem:[%s232 + $0x70] sm:$0xff]
        %v338 = vld [vmem:[%s232 + $0x78] sm:$0xff]
        %v339 = vld [vmem:[%s232 + $0x80] sm:$0xff]
        %v340 = vld [vmem:[%s232 + $0x88] sm:$0xff]
        %v341 = vld [vmem:[%s232 + $0x90] sm:$0xff]
        %v342 = vld [vmem:[%s232 + $0x98] sm:$0xff]
        %v343 = vld [vmem:[%s232 + $0xa0] sm:$0xff]
        %v344 = vld [vmem:[%s232 + $0xa8] sm:$0xff]
        %v345 = vld [vmem:[%s232 + $0xb0] sm:$0xff]
        %v346 = vld [vmem:[%s232 + $0xb8] sm:$0xff]
        %v347 = vld [vmem:[%s232 + $0xc0] sm:$0xff]
        %v348 = vld [vmem:[%s232 + $0xc8] sm:$0xff]
        %v349 = vld [vmem:[%s232 + $0xd0] sm:$0xff]
        %v350 = vld [vmem:[%s232 + $0xd8] sm:$0xff]
        %v351 = vld [vmem:[%s232 + $0xe0] sm:$0xff]
        %v352 = vld [vmem:[%s232 + $0xe8] sm:$0xff]
        %v353 = vld [vmem:[%s232 + $0xf0] sm:$0xff]
        %v354 = vld [vmem:[%s232 + $0xf8] sm:$0xff]
        %v355 = vld [vmem:[%s232 + $0x100] sm:$0xff]
        %v356 = vld [vmem:[%s232 + $0x108] sm:$0xff]
        %v357 = vld [vmem:[%s232 + $0x110] sm:$0xff]
        %v358 = vld [vmem:[%s232 + $0x118] sm:$0xff]
        %v359 = vld [vmem:[%s232 + $0x120] sm:$0xff]
        %v360 = vld [vmem:[%s232 + $0x128] sm:$0xff]
        %v361 = vld [vmem:[%s232 + $0x130] sm:$0xff]
        %v362 = vld [vmem:[%s232 + $0x138] sm:$0xff]
        %v363 = vld [vmem:[%s232 + $0x140] sm:$0xff]
        %v364 = vld [vmem:[%s232 + $0x148] sm:$0xff]
        %v365 = vld [vmem:[%s232 + $0x150] sm:$0xff]
        %v366 = vld [vmem:[%s232 + $0x158] sm:$0xff]
        %v367 = vld [vmem:[%s232 + $0x160] sm:$0xff]
        %v368 = vld [vmem:[%s232 + $0x168] sm:$0xff]
        %v369 = vld [vmem:[%s232 + $0x170] sm:$0xff]
        %v370 = vld [vmem:[%s232 + $0x178] sm:$0xff]
        %v371 = vld [vmem:[%s232 + $0x180] sm:$0xff]
        %v372 = vld [vmem:[%s232 + $0x188] sm:$0xff]
        %v373 = vld [vmem:[%s232 + $0x190] sm:$0xff]
        %v374 = vld [vmem:[%s232 + $0x198] sm:$0xff]
        %v375 = vld [vmem:[%s232 + $0x1a0] sm:$0xff]
        %v376 = vld [vmem:[%s232 + $0x1a8] sm:$0xff]
        %v377 = vld [vmem:[%s232 + $0x1b0] sm:$0xff]
        %v378 = vld [vmem:[%s232 + $0x1b8] sm:$0xff]
        %v379 = vld [vmem:[%s232 + $0x1c0] sm:$0xff]
        %v380 = vld [vmem:[%s232 + $0x1c8] sm:$0xff]
        %v381 = vld [vmem:[%s232 + $0x1d0] sm:$0xff]
        %v382 = vld [vmem:[%s232 + $0x1d8] sm:$0xff]
        %v383 = vld [vmem:[%s232 + $0x1e0] sm:$0xff]
        %v384 = vld [vmem:[%s232 + $0x1e8] sm:$0xff]
        %v385 = vld [vmem:[%s232 + $0x1f0] sm:$0xff]
        %v386 = vld [vmem:[%s232 + $0x1f8] sm:$0xff]
        %v387 = vld [vmem:[%s232 + $0x200] sm:$0xff]
        %v388 = vld [vmem:[%s232 + $0x208] sm:$0xff]
        %v389 = vld [vmem:[%s232 + $0x210] sm:$0xff]
        %v390 = vld [vmem:[%s232 + $0x218] sm:$0xff]
        %v391 = vld [vmem:[%s232 + $0x220] sm:$0xff]
        %v392 = vld [vmem:[%s232 + $0x228] sm:$0xff]
        %v393 = vld [vmem:[%s232 + $0x230] sm:$0xff]
        %v394 = vld [vmem:[%s232 + $0x238] sm:$0xff]
        %v395 = vld [vmem:[%s232 + $0x240] sm:$0xff]
        %v396 = vld [vmem:[%s232 + $0x248] sm:$0xff]
        %v397 = vld [vmem:[%s232 + $0x250] sm:$0xff]
        %v398 = vld [vmem:[%s232 + $0x258] sm:$0xff]
        %v399 = vld [vmem:[%s232 + $0x260] sm:$0xff]
        %v400 = vld [vmem:[%s232 + $0x268] sm:$0xff]
        %v401 = vld [vmem:[%s232 + $0x270] sm:$0xff]
        %v402 = vld [vmem:[%s232 + $0x278] sm:$0xff]
        %v403 = vld [vmem:[%s198] sm:$0xff]
        %v404 = vld [vmem:[%s198 + $0x8] sm:$0xff]
        %v405 = vld [vmem:[%s198 + $0x10] sm:$0xff]
        %v406 = vld [vmem:[%s198 + $0x18] sm:$0xff]
        %v407 = vld [vmem:[%s198 + $0x20] sm:$0xff]
        %v408 = vld [vmem:[%s198 + $0x28] sm:$0xff]
        %v409 = vld [vmem:[%s198 + $0x30] sm:$0xff]
        %v410 = vld [vmem:[%s198 + $0x38] sm:$0xff]
        %v411 = vld [vmem:[%s198 + $0x40] sm:$0xff]
        %v412 = vld [vmem:[%s198 + $0x48] sm:$0xff]
        %v413 = vld [vmem:[%s198 + $0x50] sm:$0xff]
        %v414 = vld [vmem:[%s198 + $0x58] sm:$0xff]
        %v415 = vld [vmem:[%s198 + $0x60] sm:$0xff]
        %v416 = vld [vmem:[%s198 + $0x68] sm:$0xff]
        %v417 = vld [vmem:[%s198 + $0x70] sm:$0xff]
        %v418 = vld [vmem:[%s198 + $0x78] sm:$0xff]
        %v419 = vld [vmem:[%s198 + $0x80] sm:$0xff]
        %v420 = vld [vmem:[%s198 + $0x88] sm:$0xff]
        %v421 = vld [vmem:[%s198 + $0x90] sm:$0xff]
        %v422 = vld [vmem:[%s198 + $0x98] sm:$0xff]
        %v423 = vld [vmem:[%s198 + $0xa0] sm:$0xff]
        %v424 = vld [vmem:[%s198 + $0xa8] sm:$0xff]
        %v425 = vld [vmem:[%s198 + $0xb0] sm:$0xff]
        %v426 = vld [vmem:[%s198 + $0xb8] sm:$0xff]
        %v427 = vld [vmem:[%s198 + $0xc0] sm:$0xff]
        %v428 = vld [vmem:[%s198 + $0xc8] sm:$0xff]
        %v429 = vld [vmem:[%s198 + $0xd0] sm:$0xff]
        %v430 = vld [vmem:[%s198 + $0xd8] sm:$0xff]
        %v431 = vld [vmem:[%s198 + $0xe0] sm:$0xff]
        %v432 = vld [vmem:[%s198 + $0xe8] sm:$0xff]
        %v433 = vld [vmem:[%s198 + $0xf0] sm:$0xff]
        %v434 = vld [vmem:[%s198 + $0xf8] sm:$0xff]
        %v435 = vld [vmem:[%s198 + $0x100] sm:$0xff]
        %v436 = vld [vmem:[%s198 + $0x108] sm:$0xff]
        %v437 = vld [vmem:[%s198 + $0x110] sm:$0xff]
        %v438 = vld [vmem:[%s198 + $0x118] sm:$0xff]
        %v439 = vld [vmem:[%s198 + $0x120] sm:$0xff]
        %v440 = vld [vmem:[%s198 + $0x128] sm:$0xff]
        %v441 = vld [vmem:[%s198 + $0x130] sm:$0xff]
        %v442 = vld [vmem:[%s198 + $0x138] sm:$0xff]
        %v443 = vld [vmem:[%s198 + $0x140] sm:$0xff]
        %v444 = vld [vmem:[%s198 + $0x148] sm:$0xff]
        %v445 = vld [vmem:[%s198 + $0x150] sm:$0xff]
        %v446 = vld [vmem:[%s198 + $0x158] sm:$0xff]
        %v447 = vld [vmem:[%s198 + $0x160] sm:$0xff]
        %v448 = vld [vmem:[%s198 + $0x168] sm:$0xff]
        %v449 = vld [vmem:[%s198 + $0x170] sm:$0xff]
        %v450 = vld [vmem:[%s198 + $0x178] sm:$0xff]
        %v451 = vld [vmem:[%s198 + $0x180] sm:$0xff]
        %v452 = vld [vmem:[%s198 + $0x188] sm:$0xff]
        %v453 = vld [vmem:[%s198 + $0x190] sm:$0xff]
        %v454 = vld [vmem:[%s198 + $0x198] sm:$0xff]
        %v455 = vld [vmem:[%s198 + $0x1a0] sm:$0xff]
        %v456 = vld [vmem:[%s198 + $0x1a8] sm:$0xff]
        %v457 = vld [vmem:[%s198 + $0x1b0] sm:$0xff]
        %v458 = vld [vmem:[%s198 + $0x1b8] sm:$0xff]
        %v459 = vld [vmem:[%s198 + $0x1c0] sm:$0xff]
        %v460 = vld [vmem:[%s198 + $0x1c8] sm:$0xff]
        %v461 = vld [vmem:[%s198 + $0x1d0] sm:$0xff]
        %v462 = vld [vmem:[%s198 + $0x1d8] sm:$0xff]
        %v463 = vld [vmem:[%s198 + $0x1e0] sm:$0xff]
        %v464 = vld [vmem:[%s198 + $0x1e8] sm:$0xff]
        %v465 = vld [vmem:[%s198 + $0x1f0] sm:$0xff]
        %v466 = vld [vmem:[%s198 + $0x1f8] sm:$0xff]
        %v467 = vld [vmem:[%s198 + $0x200] sm:$0xff]
        %v468 = vld [vmem:[%s198 + $0x208] sm:$0xff]
        %v469 = vld [vmem:[%s198 + $0x210] sm:$0xff]
        %v470 = vld [vmem:[%s198 + $0x218] sm:$0xff]
        %v471 = vld [vmem:[%s198 + $0x220] sm:$0xff]
        %v472 = vld [vmem:[%s198 + $0x228] sm:$0xff]
        %v473 = vld [vmem:[%s198 + $0x230] sm:$0xff]
        %v474 = vld [vmem:[%s198 + $0x238] sm:$0xff]
        %v475 = vld [vmem:[%s198 + $0x240] sm:$0xff]
        %v476 = vld [vmem:[%s198 + $0x248] sm:$0xff]
        %v477 = vld [vmem:[%s198 + $0x250] sm:$0xff]
        %v478 = vld [vmem:[%s198 + $0x258] sm:$0xff]
        %v479 = vld [vmem:[%s198 + $0x260] sm:$0xff]
        %v480 = vld [vmem:[%s198 + $0x268] sm:$0xff]
        %v481 = vld [vmem:[%s198 + $0x270] sm:$0xff]
        %v482 = vld [vmem:[%s198 + $0x278] sm:$0xff]
        %v483 = vld [vmem:[%s198 + $0x280] sm:$0xff]
        %v484 = vld [vmem:[%s198 + $0x288] sm:$0xff]
        %v485 = vld [vmem:[%s198 + $0x290] sm:$0xff]
        %v486 = vld [vmem:[%s198 + $0x298] sm:$0xff]
        %v487 = vld [vmem:[%s198 + $0x2a0] sm:$0xff]
        %v488 = vld [vmem:[%s198 + $0x2a8] sm:$0xff]
        %v489 = vld [vmem:[%s198 + $0x2b0] sm:$0xff]
        %v490 = vld [vmem:[%s198 + $0x2b8] sm:$0xff]
        %v491 = vld [vmem:[%s198 + $0x2c0] sm:$0xff]
        %v492 = vld [vmem:[%s198 + $0x2c8] sm:$0xff]
        %v493 = vld [vmem:[%s198 + $0x2d0] sm:$0xff]
        %v494 = vld [vmem:[%s198 + $0x2d8] sm:$0xff]
        %v495 = vld [vmem:[%s198 + $0x2e0] sm:$0xff]
        %v496 = vld [vmem:[%s198 + $0x2e8] sm:$0xff]
        %v497 = vld [vmem:[%s198 + $0x2f0] sm:$0xff]
        %v498 = vld [vmem:[%s198 + $0x2f8] sm:$0xff]
        %v499 = vld [vmem:[%s198 + $0x300] sm:$0xff]
        %v500 = vld [vmem:[%s198 + $0x308] sm:$0xff]
        %v501 = vld [vmem:[%s198 + $0x310] sm:$0xff]
        %v502 = vld [vmem:[%s198 + $0x318] sm:$0xff]
        %v503 = vld [vmem:[%s198 + $0x320] sm:$0xff]
        %v504 = vld [vmem:[%s198 + $0x328] sm:$0xff]
        %v505 = vld [vmem:[%s198 + $0x330] sm:$0xff]
        %v506 = vld [vmem:[%s198 + $0x338] sm:$0xff]
        %v507 = vld [vmem:[%s198 + $0x340] sm:$0xff]
        %v508 = vld [vmem:[%s198 + $0x348] sm:$0xff]
        %v509 = vld [vmem:[%s198 + $0x350] sm:$0xff]
        %v510 = vld [vmem:[%s198 + $0x358] sm:$0xff]
        %v511 = vld [vmem:[%s198 + $0x360] sm:$0xff]
        %v512 = vld [vmem:[%s198 + $0x368] sm:$0xff]
        %v513 = vld [vmem:[%s198 + $0x370] sm:$0xff]
        %v514 = vld [vmem:[%s198 + $0x378] sm:$0xff]
        %v515 = vld [vmem:[%s198 + $0x380] sm:$0xff]
        %v516 = vld [vmem:[%s198 + $0x388] sm:$0xff]
        %v517 = vld [vmem:[%s198 + $0x390] sm:$0xff]
        %v518 = vld [vmem:[%s198 + $0x398] sm:$0xff]
        %v519 = vld [vmem:[%s198 + $0x3a0] sm:$0xff]
        %v520 = vld [vmem:[%s198 + $0x3a8] sm:$0xff]
        %v521 = vld [vmem:[%s198 + $0x3b0] sm:$0xff]
        %v522 = vld [vmem:[%s198 + $0x3b8] sm:$0xff]
        %v523 = vld [vmem:[%s207] sm:$0xff]
        %v524 = vld [vmem:[%s207 + $0x8] sm:$0xff]
        %v525 = vld [vmem:[%s207 + $0x10] sm:$0xff]
        %v526 = vld [vmem:[%s207 + $0x18] sm:$0xff]
        %v527 = vld [vmem:[%s207 + $0x20] sm:$0xff]
        %v528 = vld [vmem:[%s207 + $0x28] sm:$0xff]
        %v529 = vld [vmem:[%s207 + $0x30] sm:$0xff]
        %v530 = vld [vmem:[%s207 + $0x38] sm:$0xff]
        %v531 = vld [vmem:[%s207 + $0x40] sm:$0xff]
        %v532 = vld [vmem:[%s207 + $0x48] sm:$0xff]
        %v533 = vld [vmem:[%s207 + $0x50] sm:$0xff]
        %v534 = vld [vmem:[%s207 + $0x58] sm:$0xff]
        %v535 = vld [vmem:[%s207 + $0x60] sm:$0xff]
        %v536 = vld [vmem:[%s207 + $0x68] sm:$0xff]
        %v537 = vld [vmem:[%s207 + $0x70] sm:$0xff]
        %v538 = vld [vmem:[%s207 + $0x78] sm:$0xff]
        %v539 = vld [vmem:[%s207 + $0x80] sm:$0xff]
        %v540 = vld [vmem:[%s207 + $0x88] sm:$0xff]
        %v541 = vld [vmem:[%s207 + $0x90] sm:$0xff]
        %v542 = vld [vmem:[%s207 + $0x98] sm:$0xff]
        %v543 = vld [vmem:[%s207 + $0xa0] sm:$0xff]
        %v544 = vld [vmem:[%s207 + $0xa8] sm:$0xff]
        %v545 = vld [vmem:[%s207 + $0xb0] sm:$0xff]
        %v546 = vld [vmem:[%s207 + $0xb8] sm:$0xff]
        %v547 = vld [vmem:[%s207 + $0xc0] sm:$0xff]
        %v548 = vld [vmem:[%s207 + $0xc8] sm:$0xff]
        %v549 = vld [vmem:[%s207 + $0xd0] sm:$0xff]
        %v550 = vld [vmem:[%s207 + $0xd8] sm:$0xff]
        %v551 = vld [vmem:[%s207 + $0xe0] sm:$0xff]
        %v552 = vld [vmem:[%s207 + $0xe8] sm:$0xff]
        %v553 = vld [vmem:[%s207 + $0xf0] sm:$0xff]
        %v554 = vld [vmem:[%s207 + $0xf8] sm:$0xff]
        %v555 = vld [vmem:[%s207 + $0x100] sm:$0xff]
        %v556 = vld [vmem:[%s207 + $0x108] sm:$0xff]
        %v557 = vld [vmem:[%s207 + $0x110] sm:$0xff]
        %v558 = vld [vmem:[%s207 + $0x118] sm:$0xff]
        %v559 = vld [vmem:[%s207 + $0x120] sm:$0xff]
        %v560 = vld [vmem:[%s207 + $0x128] sm:$0xff]
        %v561 = vld [vmem:[%s207 + $0x130] sm:$0xff]
        %v562 = vld [vmem:[%s207 + $0x138] sm:$0xff]
        %v563 = vld [vmem:[%s207 + $0x140] sm:$0xff]
        %v564 = vld [vmem:[%s207 + $0x148] sm:$0xff]
        %v565 = vld [vmem:[%s207 + $0x150] sm:$0xff]
        %v566 = vld [vmem:[%s207 + $0x158] sm:$0xff]
        %v567 = vld [vmem:[%s207 + $0x160] sm:$0xff]
        %v568 = vld [vmem:[%s207 + $0x168] sm:$0xff]
        %v569 = vld [vmem:[%s207 + $0x170] sm:$0xff]
        %v570 = vld [vmem:[%s207 + $0x178] sm:$0xff]
        %v571 = vld [vmem:[%s207 + $0x180] sm:$0xff]
        %v572 = vld [vmem:[%s207 + $0x188] sm:$0xff]
        %v573 = vld [vmem:[%s207 + $0x190] sm:$0xff]
        %v574 = vld [vmem:[%s207 + $0x198] sm:$0xff]
        %v575 = vld [vmem:[%s207 + $0x1a0] sm:$0xff]
        %v576 = vld [vmem:[%s207 + $0x1a8] sm:$0xff]
        %v577 = vld [vmem:[%s207 + $0x1b0] sm:$0xff]
        %v578 = vld [vmem:[%s207 + $0x1b8] sm:$0xff]
        %v579 = vld [vmem:[%s207 + $0x1c0] sm:$0xff]
        %v580 = vld [vmem:[%s207 + $0x1c8] sm:$0xff]
        %v581 = vld [vmem:[%s207 + $0x1d0] sm:$0xff]
        %v582 = vld [vmem:[%s207 + $0x1d8] sm:$0xff]
        %v583 = vld [vmem:[%s207 + $0x1e0] sm:$0xff]
        %v584 = vld [vmem:[%s207 + $0x1e8] sm:$0xff]
        %v585 = vld [vmem:[%s207 + $0x1f0] sm:$0xff]
        %v586 = vld [vmem:[%s207 + $0x1f8] sm:$0xff]
        %v587 = vld [vmem:[%s207 + $0x200] sm:$0xff]
        %v588 = vld [vmem:[%s207 + $0x208] sm:$0xff]
        %v589 = vld [vmem:[%s207 + $0x210] sm:$0xff]
        %v590 = vld [vmem:[%s207 + $0x218] sm:$0xff]
        %v591 = vld [vmem:[%s207 + $0x220] sm:$0xff]
        %v592 = vld [vmem:[%s207 + $0x228] sm:$0xff]
        %v593 = vld [vmem:[%s207 + $0x230] sm:$0xff]
        %v594 = vld [vmem:[%s207 + $0x238] sm:$0xff]
        %v595 = vld [vmem:[%s207 + $0x240] sm:$0xff]
        %v596 = vld [vmem:[%s207 + $0x248] sm:$0xff]
        %v597 = vld [vmem:[%s207 + $0x250] sm:$0xff]
        %v598 = vld [vmem:[%s207 + $0x258] sm:$0xff]
        %v599 = vld [vmem:[%s207 + $0x260] sm:$0xff]
        %v600 = vld [vmem:[%s207 + $0x268] sm:$0xff]
        %v601 = vld [vmem:[%s207 + $0x270] sm:$0xff]
        %v602 = vld [vmem:[%s207 + $0x278] sm:$0xff]
        %v603 = vld [vmem:[%s207 + $0x280] sm:$0xff]
        %v604 = vld [vmem:[%s207 + $0x288] sm:$0xff]
        %v605 = vld [vmem:[%s207 + $0x290] sm:$0xff]
        %v606 = vld [vmem:[%s207 + $0x298] sm:$0xff]
        %v607 = vld [vmem:[%s207 + $0x2a0] sm:$0xff]
        %v608 = vld [vmem:[%s207 + $0x2a8] sm:$0xff]
        %v609 = vld [vmem:[%s207 + $0x2b0] sm:$0xff]
        %v610 = vld [vmem:[%s207 + $0x2b8] sm:$0xff]
        %v611 = vld [vmem:[%s207 + $0x2c0] sm:$0xff]
        %v612 = vld [vmem:[%s207 + $0x2c8] sm:$0xff]
        %v613 = vld [vmem:[%s207 + $0x2d0] sm:$0xff]
        %v614 = vld [vmem:[%s207 + $0x2d8] sm:$0xff]
        %v615 = vld [vmem:[%s207 + $0x2e0] sm:$0xff]
        %v616 = vld [vmem:[%s207 + $0x2e8] sm:$0xff]
        %v617 = vld [vmem:[%s207 + $0x2f0] sm:$0xff]
        %v618 = vld [vmem:[%s207 + $0x2f8] sm:$0xff]
        %619 = vmatprep.subr.mxu0 %v524
        %620 = vmatpush1.xpose.msra.mxu0 %v523
        %621 = vmatprep.subr.mxu0 %v527
        %622 = vmatpush1.xpose.msra.mxu0 %v526
        %623 = vmatprep.subr.mxu0 %v530
        %624 = vmatpush1.xpose.msra.mxu0 %v529
        %625 = vmatprep.subr.mxu0 %v533
        %626 = vmatpush1.xpose.msra.mxu0 %v532
        %627 = vmatprep.subr.mxu0 %v536
        %628 = vmatpush1.xpose.msra.mxu0 %v535
        %629 = vmatprep.subr.mxu0 %v539
        %630 = vmatpush1.xpose.msra.mxu0 %v538
        %631 = vmatprep.subr.mxu0 %v542
        %632 = vmatpush1.xpose.msra.mxu0 %v541
        %633 = vmatprep.subr.mxu0 %v545
        %634 = vmatpush1.xpose.msra.mxu0 %v544
        %635 = vmatprep.subr.mxu0 %v548
        %636 = vmatpush1.xpose.msra.mxu0 %v547
        %637 = vmatprep.subr.mxu0 %v551
        %638 = vmatpush1.xpose.msra.mxu0 %v550
        %639 = vmatprep.subr.mxu0 %v554
        %640 = vmatpush1.xpose.msra.mxu0 %v553
        %641 = vmatprep.subr.mxu0 %v557
        %642 = vmatpush1.xpose.msra.mxu0 %v556
        %643 = vmatprep.subr.mxu0 %v560
        %644 = vmatpush1.xpose.msra.mxu0 %v559
        %645 = vmatprep.subr.mxu0 %v563
        %646 = vmatpush1.xpose.msra.mxu0 %v562
        %647 = vmatprep.subr.mxu0 %v566
        %648 = vmatpush1.xpose.msra.mxu0 %v565
        %649 = vmatprep.subr.mxu0 %v569
        %650 = vmatpush1.xpose.msra.mxu0 %v568
        %651 = vmatprep.subr.mxu0 %v572
        %652 = vmatpush1.xpose.msra.mxu0 %v571
        %653 = vmatprep.subr.mxu0 %v575
        %654 = vmatpush1.xpose.msra.mxu0 %v574
        %655 = vmatprep.subr.mxu0 %v578
        %656 = vmatpush1.xpose.msra.mxu0 %v577
        %657 = vmatprep.subr.mxu0 %v581
        %658 = vmatpush1.xpose.msra.mxu0 %v580
        %659 = vmatprep.subr.mxu0 %v584
        %660 = vmatpush1.xpose.msra.mxu0 %v583
        %661 = vmatprep.subr.mxu0 %v587
        %662 = vmatpush1.xpose.msra.mxu0 %v586
        %663 = vmatprep.subr.mxu0 %v590
        %664 = vmatpush1.xpose.msra.mxu0 %v589
        %665 = vmatprep.subr.mxu0 %v593
        %666 = vmatpush1.xpose.msra.mxu0 %v592
        %667 = vmatprep.subr.mxu0 %v596
        %668 = vmatpush1.xpose.msra.mxu0 %v595
        %669 = vmatprep.subr.mxu0 %v599
        %670 = vmatpush1.xpose.msra.mxu0 %v598
        %671 = vmatprep.subr.mxu0 %v602
        %672 = vmatpush1.xpose.msra.mxu0 %v601
        %673 = vmatprep.subr.mxu0 %v605
        %674 = vmatpush1.xpose.msra.mxu0 %v604
        %675 = vmatprep.subr.mxu0 %v608
        %676 = vmatpush1.xpose.msra.mxu0 %v607
        %677 = vmatprep.subr.mxu0 %v611
        %678 = vmatpush1.xpose.msra.mxu0 %v610
        %679 = vmatprep.subr.mxu0 %v614
        %680 = vmatpush1.xpose.msra.mxu0 %v613
        %681 = vmatprep.subr.mxu0 %v617
        %682 = vmatpush1.xpose.msra.mxu0 %v616
        %683 = vmatprep.mubr.f32.mxu0 %v404
        %684 = vmatmul.mubr.f32.gmra.mrb[0].mxu0 %v403
        %v685 = vpop.f32.mrb[0].mxu0
        %v686 = vadd.f32 0.0, %v685
        %v687 = vpop.f32.mrb[0].mxu0
        %v688 = vadd.f32 0.0, %v687
        %689 = vmatprep.mubr.f32.mxu0 %v407
        %690 = vmatmul.mubr.f32.gmra.mrb[0].mxu0 %v406
        %v691 = vpop.f32.mrb[0].mxu0
        %v692 = vadd.f32 0.0, %v691
        %v693 = vpop.f32.mrb[0].mxu0
        %v694 = vadd.f32 0.0, %v693
        %695 = vmatprep.mubr.f32.mxu0 %v410
        %696 = vmatmul.mubr.f32.gmra.mrb[0].mxu0 %v409
        %v697 = vpop.f32.mrb[0].mxu0
        %v698 = vadd.f32 0.0, %v697
        %v699 = vpop.f32.mrb[0].mxu0
        %v700 = vadd.f32 0.0, %v699
        %701 = vmatprep.mubr.f32.mxu0 %v413
        %702 = vmatmul.mubr.f32.gmra.mrb[0].mxu0 %v412
        %v703 = vpop.f32.mrb[0].mxu0
        %v704 = vadd.f32 0.0, %v703
        %v705 = vpop.f32.mrb[0].mxu0
        %v706 = vadd.f32 0.0, %v705
        %707 = vmatprep.mubr.f32.mxu0 %v416
        %708 = vmatmul.mubr.f32.gmra.mrb[0].mxu0 %v415
        %v709 = vpop.f32.mrb[0].mxu0
        %v710 = vadd.f32 0.0, %v709
        %v711 = vpop.f32.mrb[0].mxu0
        %v712 = vadd.f32 0.0, %v711
        %713 = vmatprep.mubr.f32.mxu0 %v419
        %714 = vmatmul.mubr.f32.gmra.mrb[0].mxu0 %v418
        %v715 = vpop.f32.mrb[0].mxu0
        %v716 = vadd.f32 0.0, %v715
        %v717 = vpop.f32.mrb[0].mxu0
        %v718 = vadd.f32 0.0, %v717
        %719 = vmatprep.mubr.f32.mxu0 %v422
        %720 = vmatmul.mubr.f32.gmra.mrb[0].mxu0 %v421
        %v721 = vpop.f32.mrb[0].mxu0
        %v722 = vadd.f32 0.0, %v721
        %v723 = vpop.f32.mrb[0].mxu0
        %v724 = vadd.f32 0.0, %v723
        %725 = vmatprep.mubr.f32.mxu0 %v425
        %726 = vmatmul.mubr.f32.gmra.mrb[0].mxu0 %v424
        %v727 = vpop.f32.mrb[0].mxu0
        %v728 = vadd.f32 0.0, %v727
        %v729 = vpop.f32.mrb[0].mxu0
        %v730 = vadd.f32 0.0, %v729
        %731 = vmatprep.mubr.f32.mxu0 %v428
        %732 = vmatmul.mubr.f32.gmra.mrb[0].mxu0 %v427
        %v733 = vpop.f32.mrb[0].mxu0
        %v734 = vadd.f32 0.0, %v733
        %v735 = vpop.f32.mrb[0].mxu0
        %v736 = vadd.f32 0.0, %v735
        %737 = vmatprep.mubr.f32.mxu0 %v431
        %738 = vmatmul.mubr.f32.gmra.mrb[0].mxu0 %v430
        %v739 = vpop.f32.mrb[0].mxu0
        %v740 = vadd.f32 0.0, %v739
        %v741 = vpop.f32.mrb[0].mxu0
        %v742 = vadd.f32 0.0, %v741
        %743 = vmatprep.mubr.f32.mxu0 %v434
        %744 = vmatmul.mubr.f32.gmra.mrb[0].mxu0 %v433
        %v745 = vpop.f32.mrb[0].mxu0
        %v746 = vadd.f32 0.0, %v745
        %v747 = vpop.f32.mrb[0].mxu0
        %v748 = vadd.f32 0.0, %v747
        %749 = vmatprep.mubr.f32.mxu0 %v437
        %750 = vmatmul.mubr.f32.gmra.mrb[0].mxu0 %v436
        %v751 = vpop.f32.mrb[0].mxu0
        %v752 = vadd.f32 0.0, %v751
        %v753 = vpop.f32.mrb[0].mxu0
        %v754 = vadd.f32 0.0, %v753
        %755 = vmatprep.mubr.f32.mxu0 %v440
        %756 = vmatmul.mubr.f32.gmra.mrb[0].mxu0 %v439
        %v757 = vpop.f32.mrb[0].mxu0
        %v758 = vadd.f32 0.0, %v757
        %v759 = vpop.f32.mrb[0].mxu0
        %v760 = vadd.f32 0.0, %v759
        %761 = vmatprep.mubr.f32.mxu0 %v443
        %762 = vmatmul.mubr.f32.gmra.mrb[0].mxu0 %v442
        %v763 = vpop.f32.mrb[0].mxu0
        %v764 = vadd.f32 0.0, %v763
        %v765 = vpop.f32.mrb[0].mxu0
        %v766 = vadd.f32 0.0, %v765
        %767 = vmatprep.mubr.f32.mxu0 %v446
        %768 = vmatmul.mubr.f32.gmra.mrb[0].mxu0 %v445
        %v769 = vpop.f32.mrb[0].mxu0
        %v770 = vadd.f32 0.0, %v769
        %v771 = vpop.f32.mrb[0].mxu0
        %v772 = vadd.f32 0.0, %v771
        %773 = vmatprep.mubr.f32.mxu0 %v449
        %774 = vmatmul.mubr.f32.gmra.mrb[0].mxu0 %v448
        %v775 = vpop.f32.mrb[0].mxu0
        %v776 = vadd.f32 0.0, %v775
        %v777 = vpop.f32.mrb[0].mxu0
        %v778 = vadd.f32 0.0, %v777
        %779 = vmatprep.mubr.f32.mxu0 %v452
        %780 = vmatmul.mubr.f32.gmra.mrb[0].mxu0 %v451
        %v781 = vpop.f32.mrb[0].mxu0
        %v782 = vadd.f32 0.0, %v781
        %v783 = vpop.f32.mrb[0].mxu0
        %v784 = vadd.f32 0.0, %v783
        %785 = vmatprep.mubr.f32.mxu0 %v455
        %786 = vmatmul.mubr.f32.gmra.mrb[0].mxu0 %v454
        %v787 = vpop.f32.mrb[0].mxu0
        %v788 = vadd.f32 0.0, %v787
        %v789 = vpop.f32.mrb[0].mxu0
        %v790 = vadd.f32 0.0, %v789
        %791 = vmatprep.mubr.f32.mxu0 %v458
        %792 = vmatmul.mubr.f32.gmra.mrb[0].mxu0 %v457
        %v793 = vpop.f32.mrb[0].mxu0
        %v794 = vadd.f32 0.0, %v793
        %v795 = vpop.f32.mrb[0].mxu0
        %v796 = vadd.f32 0.0, %v795
        %797 = vmatprep.mubr.f32.mxu0 %v461
        %798 = vmatmul.mubr.f32.gmra.mrb[0].mxu0 %v460
        %v799 = vpop.f32.mrb[0].mxu0
        %v800 = vadd.f32 0.0, %v799
        %v801 = vpop.f32.mrb[0].mxu0
        %v802 = vadd.f32 0.0, %v801
        %803 = vmatprep.mubr.f32.mxu0 %v464
        %804 = vmatmul.mubr.f32.gmra.mrb[0].mxu0 %v463
        %v805 = vpop.f32.mrb[0].mxu0
        %v806 = vadd.f32 0.0, %v805
        %v807 = vpop.f32.mrb[0].mxu0
        %v808 = vadd.f32 0.0, %v807
        %809 = vmatprep.mubr.f32.mxu0 %v467
        %810 = vmatmul.mubr.f32.gmra.mrb[0].mxu0 %v466
        %v811 = vpop.f32.mrb[0].mxu0
        %v812 = vadd.f32 0.0, %v811
        %v813 = vpop.f32.mrb[0].mxu0
        %v814 = vadd.f32 0.0, %v813
        %815 = vmatprep.mubr.f32.mxu0 %v470
        %816 = vmatmul.mubr.f32.gmra.mrb[0].mxu0 %v469
        %v817 = vpop.f32.mrb[0].mxu0
        %v818 = vadd.f32 0.0, %v817
        %v819 = vpop.f32.mrb[0].mxu0
        %v820 = vadd.f32 0.0, %v819
        %821 = vmatprep.mubr.f32.mxu0 %v473
        %822 = vmatmul.mubr.f32.gmra.mrb[0].mxu0 %v472
        %v823 = vpop.f32.mrb[0].mxu0
        %v824 = vadd.f32 0.0, %v823
        %v825 = vpop.f32.mrb[0].mxu0
        %v826 = vadd.f32 0.0, %v825
        %827 = vmatprep.mubr.f32.mxu0 %v476
        %828 = vmatmul.mubr.f32.gmra.mrb[0].mxu0 %v475
        %v829 = vpop.f32.mrb[0].mxu0
        %v830 = vadd.f32 0.0, %v829
        %v831 = vpop.f32.mrb[0].mxu0
        %v832 = vadd.f32 0.0, %v831
        %833 = vmatprep.mubr.f32.mxu0 %v479
        %834 = vmatmul.mubr.f32.gmra.mrb[0].mxu0 %v478
        %v835 = vpop.f32.mrb[0].mxu0
        %v836 = vadd.f32 0.0, %v835
        %v837 = vpop.f32.mrb[0].mxu0
        %v838 = vadd.f32 0.0, %v837
        %839 = vmatprep.mubr.f32.mxu0 %v482
        %840 = vmatmul.mubr.f32.gmra.mrb[0].mxu0 %v481
        %v841 = vpop.f32.mrb[0].mxu0
        %v842 = vadd.f32 0.0, %v841
        %v843 = vpop.f32.mrb[0].mxu0
        %v844 = vadd.f32 0.0, %v843
        %845 = vmatprep.mubr.f32.mxu0 %v485
        %846 = vmatmul.mubr.f32.gmra.mrb[0].mxu0 %v484
        %v847 = vpop.f32.mrb[0].mxu0
        %v848 = vadd.f32 0.0, %v847
        %v849 = vpop.f32.mrb[0].mxu0
        %v850 = vadd.f32 0.0, %v849
        %851 = vmatprep.mubr.f32.mxu0 %v488
        %852 = vmatmul.mubr.f32.gmra.mrb[0].mxu0 %v487
        %v853 = vpop.f32.mrb[0].mxu0
        %v854 = vadd.f32 0.0, %v853
        %v855 = vpop.f32.mrb[0].mxu0
        %v856 = vadd.f32 0.0, %v855
        %857 = vmatprep.mubr.f32.mxu0 %v491
        %858 = vmatmul.mubr.f32.gmra.mrb[0].mxu0 %v490
        %v859 = vpop.f32.mrb[0].mxu0
        %v860 = vadd.f32 0.0, %v859
        %v861 = vpop.f32.mrb[0].mxu0
        %v862 = vadd.f32 0.0, %v861
        %863 = vmatprep.mubr.f32.mxu0 %v494
        %864 = vmatmul.mubr.f32.gmra.mrb[0].mxu0 %v493
        %v865 = vpop.f32.mrb[0].mxu0
        %v866 = vadd.f32 0.0, %v865
        %v867 = vpop.f32.mrb[0].mxu0
        %v868 = vadd.f32 0.0, %v867
        %869 = vmatprep.mubr.f32.mxu0 %v497
        %870 = vmatmul.mubr.f32.gmra.mrb[0].mxu0 %v496
        %v871 = vpop.f32.mrb[0].mxu0
        %v872 = vadd.f32 0.0, %v871
        %v873 = vpop.f32.mrb[0].mxu0
        %v874 = vadd.f32 0.0, %v873
        %875 = vmatprep.mubr.f32.mxu0 %v500
        %876 = vmatmul.mubr.f32.gmra.mrb[0].mxu0 %v499
        %v877 = vpop.f32.mrb[0].mxu0
        %v878 = vadd.f32 0.0, %v877
        %v879 = vpop.f32.mrb[0].mxu0
        %v880 = vadd.f32 0.0, %v879
        %881 = vmatprep.mubr.f32.mxu0 %v503
        %882 = vmatmul.mubr.f32.gmra.mrb[0].mxu0 %v502
        %v883 = vpop.f32.mrb[0].mxu0
        %v884 = vadd.f32 0.0, %v883
        %v885 = vpop.f32.mrb[0].mxu0
        %v886 = vadd.f32 0.0, %v885
        %887 = vmatprep.mubr.f32.mxu0 %v506
        %888 = vmatmul.mubr.f32.gmra.mrb[0].mxu0 %v505
        %v889 = vpop.f32.mrb[0].mxu0
        %v890 = vadd.f32 0.0, %v889
        %v891 = vpop.f32.mrb[0].mxu0
        %v892 = vadd.f32 0.0, %v891
        %893 = vmatprep.mubr.f32.mxu0 %v509
        %894 = vmatmul.mubr.f32.gmra.mrb[0].mxu0 %v508
        %v895 = vpop.f32.mrb[0].mxu0
        %v896 = vadd.f32 0.0, %v895
        %v897 = vpop.f32.mrb[0].mxu0
        %v898 = vadd.f32 0.0, %v897
        %899 = vmatprep.mubr.f32.mxu0 %v512
        %900 = vmatmul.mubr.f32.gmra.mrb[0].mxu0 %v511
        %v901 = vpop.f32.mrb[0].mxu0
        %v902 = vadd.f32 0.0, %v901
        %v903 = vpop.f32.mrb[0].mxu0
        %v904 = vadd.f32 0.0, %v903
        %905 = vmatprep.mubr.f32.mxu0 %v515
        %906 = vmatmul.mubr.f32.gmra.mrb[0].mxu0 %v514
        %v907 = vpop.f32.mrb[0].mxu0
        %v908 = vadd.f32 0.0, %v907
        %v909 = vpop.f32.mrb[0].mxu0
        %v910 = vadd.f32 0.0, %v909
        %911 = vmatprep.mubr.f32.mxu0 %v518
        %912 = vmatmul.mubr.f32.gmra.mrb[0].mxu0 %v517
        %v913 = vpop.f32.mrb[0].mxu0
        %v914 = vadd.f32 0.0, %v913
        %v915 = vpop.f32.mrb[0].mxu0
        %v916 = vadd.f32 0.0, %v915
        %917 = vmatprep.mubr.f32.mxu0 %v521
        %918 = vmatmul.mubr.f32.gmra.mrb[0].mxu0 %v520
        %v919 = vpop.f32.mrb[0].mxu0
        %v920 = vadd.f32 0.0, %v919
        %v921 = vpop.f32.mrb[0].mxu0
        %v922 = vadd.f32 0.0, %v921
        %923 = vdwg.mxu0
        %924 = vmatprep.subr.mxu0 0.0
        %925 = vmatpush1.xpose.msra.mxu0 %v525
        %926 = vmatprep.subr.mxu0 0.0
        %927 = vmatpush1.xpose.msra.mxu0 %v528
        %928 = vmatprep.subr.mxu0 0.0
        %929 = vmatpush1.xpose.msra.mxu0 %v531
        %930 = vmatprep.subr.mxu0 0.0
        %931 = vmatpush1.xpose.msra.mxu0 %v534
        %932 = vmatprep.subr.mxu0 0.0
        %933 = vmatpush1.xpose.msra.mxu0 %v537
        %934 = vmatprep.subr.mxu0 0.0
        %935 = vmatpush1.xpose.msra.mxu0 %v540
        %936 = vmatprep.subr.mxu0 0.0
        %937 = vmatpush1.xpose.msra.mxu0 %v543
        %938 = vmatprep.subr.mxu0 0.0
        %939 = vmatpush1.xpose.msra.mxu0 %v546
        %940 = vmatprep.subr.mxu0 0.0
        %941 = vmatpush1.xpose.msra.mxu0 %v549
        %942 = vmatprep.subr.mxu0 0.0
        %943 = vmatpush1.xpose.msra.mxu0 %v552
        %944 = vmatprep.subr.mxu0 0.0
        %945 = vmatpush1.xpose.msra.mxu0 %v555
        %946 = vmatprep.subr.mxu0 0.0
        %947 = vmatpush1.xpose.msra.mxu0 %v558
        %948 = vmatprep.subr.mxu0 0.0
        %949 = vmatpush1.xpose.msra.mxu0 %v561
        %950 = vmatprep.subr.mxu0 0.0
        %951 = vmatpush1.xpose.msra.mxu0 %v564
        %952 = vmatprep.subr.mxu0 0.0
        %953 = vmatpush1.xpose.msra.mxu0 %v567
        %954 = vmatprep.subr.mxu0 0.0
        %955 = vmatpush1.xpose.msra.mxu0 %v570
        %956 = vmatprep.subr.mxu0 0.0
        %957 = vmatpush1.xpose.msra.mxu0 %v573
        %958 = vmatprep.subr.mxu0 0.0
        %959 = vmatpush1.xpose.msra.mxu0 %v576
        %960 = vmatprep.subr.mxu0 0.0
        %961 = vmatpush1.xpose.msra.mxu0 %v579
        %962 = vmatprep.subr.mxu0 0.0
        %963 = vmatpush1.xpose.msra.mxu0 %v582
        %964 = vmatprep.subr.mxu0 0.0
        %965 = vmatpush1.xpose.msra.mxu0 %v585
        %966 = vmatprep.subr.mxu0 0.0
        %967 = vmatpush1.xpose.msra.mxu0 %v588
        %968 = vmatprep.subr.mxu0 0.0
        %969 = vmatpush1.xpose.msra.mxu0 %v591
        %970 = vmatprep.subr.mxu0 0.0
        %971 = vmatpush1.xpose.msra.mxu0 %v594
        %972 = vmatprep.subr.mxu0 0.0
        %973 = vmatpush1.xpose.msra.mxu0 %v597
        %974 = vmatprep.subr.mxu0 0.0
        %975 = vmatpush1.xpose.msra.mxu0 %v600
        %976 = vmatprep.subr.mxu0 0.0
        %977 = vmatpush1.xpose.msra.mxu0 %v603
        %978 = vmatprep.subr.mxu0 0.0
        %979 = vmatpush1.xpose.msra.mxu0 %v606
        %980 = vmatprep.subr.mxu0 0.0
        %981 = vmatpush1.xpose.msra.mxu0 %v609
        %982 = vmatprep.subr.mxu0 0.0
        %983 = vmatpush1.xpose.msra.mxu0 %v612
        %984 = vmatprep.subr.mxu0 0.0
        %985 = vmatpush1.xpose.msra.mxu0 %v615
        %986 = vmatprep.subr.mxu0 0.0
        %987 = vmatpush1.xpose.msra.mxu0 %v618
        %988 = vmatprep.mubr.f32.mxu0 0.0
        %989 = vmatmul.mubr.f32.gmra.mrb[0].mxu0 %v405
        %v990 = vpop.f32.mrb[0].mxu0
        %v991 = vadd.f32 %v686, %v990
        %v992 = vpop.f32.mrb[0].mxu0
        %v993 = vadd.f32 %v688, %v992
        %994 = vmatprep.mubr.f32.mxu0 0.0
        %995 = vmatmul.mubr.f32.gmra.mrb[0].mxu0 %v408
        %v996 = vpop.f32.mrb[0].mxu0
        %v997 = vadd.f32 %v692, %v996
        %v998 = vpop.f32.mrb[0].mxu0
        %v999 = vadd.f32 %v694, %v998
        %1000 = vmatprep.mubr.f32.mxu0 0.0
        %1001 = vmatmul.mubr.f32.gmra.mrb[0].mxu0 %v411
        %v1002 = vpop.f32.mrb[0].mxu0
        %v1003 = vadd.f32 %v698, %v1002
        %v1004 = vpop.f32.mrb[0].mxu0
        %v1005 = vadd.f32 %v700, %v1004
        %1006 = vmatprep.mubr.f32.mxu0 0.0
        %1007 = vmatmul.mubr.f32.gmra.mrb[0].mxu0 %v414
        %v1008 = vpop.f32.mrb[0].mxu0
        %v1009 = vadd.f32 %v704, %v1008
        %v1010 = vpop.f32.mrb[0].mxu0
        %v1011 = vadd.f32 %v706, %v1010
        %1012 = vmatprep.mubr.f32.mxu0 0.0
        %1013 = vmatmul.mubr.f32.gmra.mrb[0].mxu0 %v417
        %v1014 = vpop.f32.mrb[0].mxu0
        %v1015 = vadd.f32 %v710, %v1014
        %v1016 = vpop.f32.mrb[0].mxu0
        %v1017 = vadd.f32 %v712, %v1016
        %1018 = vmatprep.mubr.f32.mxu0 0.0
        %1019 = vmatmul.mubr.f32.gmra.mrb[0].mxu0 %v420
        %v1020 = vpop.f32.mrb[0].mxu0
        %v1021 = vadd.f32 %v716, %v1020
        %v1022 = vpop.f32.mrb[0].mxu0
        %v1023 = vadd.f32 %v718, %v1022
        %1024 = vmatprep.mubr.f32.mxu0 0.0
        %1025 = vmatmul.mubr.f32.gmra.mrb[0].mxu0 %v423
        %v1026 = vpop.f32.mrb[0].mxu0
        %v1027 = vadd.f32 %v722, %v1026
        %v1028 = vpop.f32.mrb[0].mxu0
        %v1029 = vadd.f32 %v724, %v1028
        %1030 = vmatprep.mubr.f32.mxu0 0.0
        %1031 = vmatmul.mubr.f32.gmra.mrb[0].mxu0 %v426
        %v1032 = vpop.f32.mrb[0].mxu0
        %v1033 = vadd.f32 %v728, %v1032
        %v1034 = vpop.f32.mrb[0].mxu0
        %v1035 = vadd.f32 %v730, %v1034
        %1036 = vmatprep.mubr.f32.mxu0 0.0
        %1037 = vmatmul.mubr.f32.gmra.mrb[0].mxu0 %v429
        %v1038 = vpop.f32.mrb[0].mxu0
        %v1039 = vadd.f32 %v734, %v1038
        %v1040 = vpop.f32.mrb[0].mxu0
        %v1041 = vadd.f32 %v736, %v1040
        %1042 = vmatprep.mubr.f32.mxu0 0.0
        %1043 = vmatmul.mubr.f32.gmra.mrb[0].mxu0 %v432
        %v1044 = vpop.f32.mrb[0].mxu0
        %v1045 = vadd.f32 %v740, %v1044
        %v1046 = vpop.f32.mrb[0].mxu0
        %v1047 = vadd.f32 %v742, %v1046
        %1048 = vmatprep.mubr.f32.mxu0 0.0
        %1049 = vmatmul.mubr.f32.gmra.mrb[0].mxu0 %v435
        %v1050 = vpop.f32.mrb[0].mxu0
        %v1051 = vadd.f32 %v746, %v1050
        %v1052 = vpop.f32.mrb[0].mxu0
        %v1053 = vadd.f32 %v748, %v1052
        %1054 = vmatprep.mubr.f32.mxu0 0.0
        %1055 = vmatmul.mubr.f32.gmra.mrb[0].mxu0 %v438
        %v1056 = vpop.f32.mrb[0].mxu0
        %v1057 = vadd.f32 %v752, %v1056
        %v1058 = vpop.f32.mrb[0].mxu0
        %v1059 = vadd.f32 %v754, %v1058
        %1060 = vmatprep.mubr.f32.mxu0 0.0
        %1061 = vmatmul.mubr.f32.gmra.mrb[0].mxu0 %v441
        %v1062 = vpop.f32.mrb[0].mxu0
        %v1063 = vadd.f32 %v758, %v1062
        %v1064 = vpop.f32.mrb[0].mxu0
        %v1065 = vadd.f32 %v760, %v1064
        %1066 = vmatprep.mubr.f32.mxu0 0.0
        %1067 = vmatmul.mubr.f32.gmra.mrb[0].mxu0 %v444
        %v1068 = vpop.f32.mrb[0].mxu0
        %v1069 = vadd.f32 %v764, %v1068
        %v1070 = vpop.f32.mrb[0].mxu0
        %v1071 = vadd.f32 %v766, %v1070
        %1072 = vmatprep.mubr.f32.mxu0 0.0
        %1073 = vmatmul.mubr.f32.gmra.mrb[0].mxu0 %v447
        %v1074 = vpop.f32.mrb[0].mxu0
        %v1075 = vadd.f32 %v770, %v1074
        %v1076 = vpop.f32.mrb[0].mxu0
        %v1077 = vadd.f32 %v772, %v1076
        %1078 = vmatprep.mubr.f32.mxu0 0.0
        %1079 = vmatmul.mubr.f32.gmra.mrb[0].mxu0 %v450
        %v1080 = vpop.f32.mrb[0].mxu0
        %v1081 = vadd.f32 %v776, %v1080
        %v1082 = vpop.f32.mrb[0].mxu0
        %v1083 = vadd.f32 %v778, %v1082
        %1084 = vmatprep.mubr.f32.mxu0 0.0
        %1085 = vmatmul.mubr.f32.gmra.mrb[0].mxu0 %v453
        %v1086 = vpop.f32.mrb[0].mxu0
        %v1087 = vadd.f32 %v782, %v1086
        %v1088 = vpop.f32.mrb[0].mxu0
        %v1089 = vadd.f32 %v784, %v1088
        %1090 = vmatprep.mubr.f32.mxu0 0.0
        %1091 = vmatmul.mubr.f32.gmra.mrb[0].mxu0 %v456
        %v1092 = vpop.f32.mrb[0].mxu0
        %v1093 = vadd.f32 %v788, %v1092
        %v1094 = vpop.f32.mrb[0].mxu0
        %v1095 = vadd.f32 %v790, %v1094
        %1096 = vmatprep.mubr.f32.mxu0 0.0
        %1097 = vmatmul.mubr.f32.gmra.mrb[0].mxu0 %v459
        %v1098 = vpop.f32.mrb[0].mxu0
        %v1099 = vadd.f32 %v794, %v1098
        %v1100 = vpop.f32.mrb[0].mxu0
        %v1101 = vadd.f32 %v796, %v1100
        %1102 = vmatprep.mubr.f32.mxu0 0.0
        %1103 = vmatmul.mubr.f32.gmra.mrb[0].mxu0 %v462
        %v1104 = vpop.f32.mrb[0].mxu0
        %v1105 = vadd.f32 %v800, %v1104
        %v1106 = vpop.f32.mrb[0].mxu0
        %v1107 = vadd.f32 %v802, %v1106
        %1108 = vmatprep.mubr.f32.mxu0 0.0
        %1109 = vmatmul.mubr.f32.gmra.mrb[0].mxu0 %v465
        %v1110 = vpop.f32.mrb[0].mxu0
        %v1111 = vadd.f32 %v806, %v1110
        %v1112 = vpop.f32.mrb[0].mxu0
        %v1113 = vadd.f32 %v808, %v1112
        %1114 = vmatprep.mubr.f32.mxu0 0.0
        %1115 = vmatmul.mubr.f32.gmra.mrb[0].mxu0 %v468
        %v1116 = vpop.f32.mrb[0].mxu0
        %v1117 = vadd.f32 %v812, %v1116
        %v1118 = vpop.f32.mrb[0].mxu0
        %v1119 = vadd.f32 %v814, %v1118
        %1120 = vmatprep.mubr.f32.mxu0 0.0
        %1121 = vmatmul.mubr.f32.gmra.mrb[0].mxu0 %v471
        %v1122 = vpop.f32.mrb[0].mxu0
        %v1123 = vadd.f32 %v818, %v1122
        %v1124 = vpop.f32.mrb[0].mxu0
        %v1125 = vadd.f32 %v820, %v1124
        %1126 = vmatprep.mubr.f32.mxu0 0.0
        %1127 = vmatmul.mubr.f32.gmra.mrb[0].mxu0 %v474
        %v1128 = vpop.f32.mrb[0].mxu0
        %v1129 = vadd.f32 %v824, %v1128
        %v1130 = vpop.f32.mrb[0].mxu0
        %v1131 = vadd.f32 %v826, %v1130
        %1132 = vmatprep.mubr.f32.mxu0 0.0
        %1133 = vmatmul.mubr.f32.gmra.mrb[0].mxu0 %v477
        %v1134 = vpop.f32.mrb[0].mxu0
        %v1135 = vadd.f32 %v830, %v1134
        %v1136 = vpop.f32.mrb[0].mxu0
        %v1137 = vadd.f32 %v832, %v1136
        %1138 = vmatprep.mubr.f32.mxu0 0.0
        %1139 = vmatmul.mubr.f32.gmra.mrb[0].mxu0 %v480
        %v1140 = vpop.f32.mrb[0].mxu0
        %v1141 = vadd.f32 %v836, %v1140
        %v1142 = vpop.f32.mrb[0].mxu0
        %v1143 = vadd.f32 %v838, %v1142
        %1144 = vmatprep.mubr.f32.mxu0 0.0
        %1145 = vmatmul.mubr.f32.gmra.mrb[0].mxu0 %v483
        %v1146 = vpop.f32.mrb[0].mxu0
        %v1147 = vadd.f32 %v842, %v1146
        %v1148 = vpop.f32.mrb[0].mxu0
        %v1149 = vadd.f32 %v844, %v1148
        %1150 = vmatprep.mubr.f32.mxu0 0.0
        %1151 = vmatmul.mubr.f32.gmra.mrb[0].mxu0 %v486
        %v1152 = vpop.f32.mrb[0].mxu0
        %v1153 = vadd.f32 %v848, %v1152
        %v1154 = vpop.f32.mrb[0].mxu0
        %v1155 = vadd.f32 %v850, %v1154
        %1156 = vmatprep.mubr.f32.mxu0 0.0
        %1157 = vmatmul.mubr.f32.gmra.mrb[0].mxu0 %v489
        %v1158 = vpop.f32.mrb[0].mxu0
        %v1159 = vadd.f32 %v854, %v1158
        %v1160 = vpop.f32.mrb[0].mxu0
        %v1161 = vadd.f32 %v856, %v1160
        %1162 = vmatprep.mubr.f32.mxu0 0.0
        %1163 = vmatmul.mubr.f32.gmra.mrb[0].mxu0 %v492
        %v1164 = vpop.f32.mrb[0].mxu0
        %v1165 = vadd.f32 %v860, %v1164
        %v1166 = vpop.f32.mrb[0].mxu0
        %v1167 = vadd.f32 %v862, %v1166
        %1168 = vmatprep.mubr.f32.mxu0 0.0
        %1169 = vmatmul.mubr.f32.gmra.mrb[0].mxu0 %v495
        %v1170 = vpop.f32.mrb[0].mxu0
        %v1171 = vadd.f32 %v866, %v1170
        %v1172 = vpop.f32.mrb[0].mxu0
        %v1173 = vadd.f32 %v868, %v1172
        %1174 = vmatprep.mubr.f32.mxu0 0.0
        %1175 = vmatmul.mubr.f32.gmra.mrb[0].mxu0 %v498
        %v1176 = vpop.f32.mrb[0].mxu0
        %v1177 = vadd.f32 %v872, %v1176
        %v1178 = vpop.f32.mrb[0].mxu0
        %v1179 = vadd.f32 %v874, %v1178
        %1180 = vmatprep.mubr.f32.mxu0 0.0
        %1181 = vmatmul.mubr.f32.gmra.mrb[0].mxu0 %v501
        %v1182 = vpop.f32.mrb[0].mxu0
        %v1183 = vadd.f32 %v878, %v1182
        %v1184 = vpop.f32.mrb[0].mxu0
        %v1185 = vadd.f32 %v880, %v1184
        %1186 = vmatprep.mubr.f32.mxu0 0.0
        %1187 = vmatmul.mubr.f32.gmra.mrb[0].mxu0 %v504
        %v1188 = vpop.f32.mrb[0].mxu0
        %v1189 = vadd.f32 %v884, %v1188
        %v1190 = vpop.f32.mrb[0].mxu0
        %v1191 = vadd.f32 %v886, %v1190
        %1192 = vmatprep.mubr.f32.mxu0 0.0
        %1193 = vmatmul.mubr.f32.gmra.mrb[0].mxu0 %v507
        %v1194 = vpop.f32.mrb[0].mxu0
        %v1195 = vadd.f32 %v890, %v1194
        %v1196 = vpop.f32.mrb[0].mxu0
        %v1197 = vadd.f32 %v892, %v1196
        %1198 = vmatprep.mubr.f32.mxu0 0.0
        %1199 = vmatmul.mubr.f32.gmra.mrb[0].mxu0 %v510
        %v1200 = vpop.f32.mrb[0].mxu0
        %v1201 = vadd.f32 %v896, %v1200
        %v1202 = vpop.f32.mrb[0].mxu0
        %v1203 = vadd.f32 %v898, %v1202
        %1204 = vmatprep.mubr.f32.mxu0 0.0
        %1205 = vmatmul.mubr.f32.gmra.mrb[0].mxu0 %v513
        %v1206 = vpop.f32.mrb[0].mxu0
        %v1207 = vadd.f32 %v902, %v1206
        %v1208 = vpop.f32.mrb[0].mxu0
        %v1209 = vadd.f32 %v904, %v1208
        %1210 = vmatprep.mubr.f32.mxu0 0.0
        %1211 = vmatmul.mubr.f32.gmra.mrb[0].mxu0 %v516
        %v1212 = vpop.f32.mrb[0].mxu0
        %v1213 = vadd.f32 %v908, %v1212
        %v1214 = vpop.f32.mrb[0].mxu0
        %v1215 = vadd.f32 %v910, %v1214
        %1216 = vmatprep.mubr.f32.mxu0 0.0
        %1217 = vmatmul.mubr.f32.gmra.mrb[0].mxu0 %v519
        %v1218 = vpop.f32.mrb[0].mxu0
        %v1219 = vadd.f32 %v914, %v1218
        %v1220 = vpop.f32.mrb[0].mxu0
        %v1221 = vadd.f32 %v916, %v1220
        %1222 = vmatprep.mubr.f32.mxu0 0.0
        %1223 = vmatmul.mubr.f32.gmra.mrb[0].mxu0 %v522
        %v1224 = vpop.f32.mrb[0].mxu0
        %v1225 = vadd.f32 %v920, %v1224
        %v1226 = vpop.f32.mrb[0].mxu0
        %v1227 = vadd.f32 %v922, %v1226
        %1228 = vdwg.mxu0
        %v1229 = vadd.f32 %v323, %v991
        %v1230 = vadd.f32 %v324, %v993
        %v1231 = vadd.f32 %v325, %v997
        %v1232 = vadd.f32 %v326, %v999
        %v1233 = vadd.f32 %v327, %v1003
        %v1234 = vadd.f32 %v328, %v1005
        %v1235 = vadd.f32 %v329, %v1009
        %v1236 = vadd.f32 %v330, %v1011
        %v1237 = vadd.f32 %v331, %v1015
        %v1238 = vadd.f32 %v332, %v1017
        %v1239 = vadd.f32 %v333, %v1021
        %v1240 = vadd.f32 %v334, %v1023
        %v1241 = vadd.f32 %v335, %v1027
        %v1242 = vadd.f32 %v336, %v1029
        %v1243 = vadd.f32 %v337, %v1033
        %v1244 = vadd.f32 %v338, %v1035
        %v1245 = vadd.f32 %v339, %v1039
        %v1246 = vadd.f32 %v340, %v1041
        %v1247 = vadd.f32 %v341, %v1045
        %v1248 = vadd.f32 %v342, %v1047
        %v1249 = vadd.f32 %v343, %v1051
        %v1250 = vadd.f32 %v344, %v1053
        %v1251 = vadd.f32 %v345, %v1057
        %v1252 = vadd.f32 %v346, %v1059
        %v1253 = vadd.f32 %v347, %v1063
        %v1254 = vadd.f32 %v348, %v1065
        %v1255 = vadd.f32 %v349, %v1069
        %v1256 = vadd.f32 %v350, %v1071
        %v1257 = vadd.f32 %v351, %v1075
        %v1258 = vadd.f32 %v352, %v1077
        %v1259 = vadd.f32 %v353, %v1081
        %v1260 = vadd.f32 %v354, %v1083
        %v1261 = vadd.f32 %v355, %v1087
        %v1262 = vadd.f32 %v356, %v1089
        %v1263 = vadd.f32 %v357, %v1093
        %v1264 = vadd.f32 %v358, %v1095
        %v1265 = vadd.f32 %v359, %v1099
        %v1266 = vadd.f32 %v360, %v1101
        %v1267 = vadd.f32 %v361, %v1105
        %v1268 = vadd.f32 %v362, %v1107
        %v1269 = vadd.f32 %v363, %v1111
        %v1270 = vadd.f32 %v364, %v1113
        %v1271 = vadd.f32 %v365, %v1117
        %v1272 = vadd.f32 %v366, %v1119
        %v1273 = vadd.f32 %v367, %v1123
        %v1274 = vadd.f32 %v368, %v1125
        %v1275 = vadd.f32 %v369, %v1129
        %v1276 = vadd.f32 %v370, %v1131
        %v1277 = vadd.f32 %v371, %v1135
        %v1278 = vadd.f32 %v372, %v1137
        %v1279 = vadd.f32 %v373, %v1141
        %v1280 = vadd.f32 %v374, %v1143
        %v1281 = vadd.f32 %v375, %v1147
        %v1282 = vadd.f32 %v376, %v1149
        %v1283 = vadd.f32 %v377, %v1153
        %v1284 = vadd.f32 %v378, %v1155
        %v1285 = vadd.f32 %v379, %v1159
        %v1286 = vadd.f32 %v380, %v1161
        %v1287 = vadd.f32 %v381, %v1165
        %v1288 = vadd.f32 %v382, %v1167
        %v1289 = vadd.f32 %v383, %v1171
        %v1290 = vadd.f32 %v384, %v1173
        %v1291 = vadd.f32 %v385, %v1177
        %v1292 = vadd.f32 %v386, %v1179
        %v1293 = vadd.f32 %v387, %v1183
        %v1294 = vadd.f32 %v388, %v1185
        %v1295 = vadd.f32 %v389, %v1189
        %v1296 = vadd.f32 %v390, %v1191
        %v1297 = vadd.f32 %v391, %v1195
        %v1298 = vadd.f32 %v392, %v1197
        %v1299 = vadd.f32 %v393, %v1201
        %v1300 = vadd.f32 %v394, %v1203
        %v1301 = vadd.f32 %v395, %v1207
        %v1302 = vadd.f32 %v396, %v1209
        %v1303 = vadd.f32 %v397, %v1213
        %v1304 = vadd.f32 %v398, %v1215
        %v1305 = vadd.f32 %v399, %v1219
        %v1306 = vadd.f32 %v400, %v1221
        %v1307 = vadd.f32 %v401, %v1225
        %v1308 = vadd.f32 %v402, %v1227
        %1309 = vst [vmem:[%s232] sm:$0xff] %v1229
        %1310 = vst [vmem:[%s232 + $0x8] sm:$0xff] %v1230
        %1311 = vst [vmem:[%s232 + $0x10] sm:$0xff] %v1231
        %1312 = vst [vmem:[%s232 + $0x18] sm:$0xff] %v1232
        %1313 = vst [vmem:[%s232 + $0x20] sm:$0xff] %v1233
        %1314 = vst [vmem:[%s232 + $0x28] sm:$0xff] %v1234
        %1315 = vst [vmem:[%s232 + $0x30] sm:$0xff] %v1235
        %1316 = vst [vmem:[%s232 + $0x38] sm:$0xff] %v1236
        %1317 = vst [vmem:[%s232 + $0x40] sm:$0xff] %v1237
        %1318 = vst [vmem:[%s232 + $0x48] sm:$0xff] %v1238
        %1319 = vst [vmem:[%s232 + $0x50] sm:$0xff] %v1239
        %1320 = vst [vmem:[%s232 + $0x58] sm:$0xff] %v1240
        %1321 = vst [vmem:[%s232 + $0x60] sm:$0xff] %v1241
        %1322 = vst [vmem:[%s232 + $0x68] sm:$0xff] %v1242
        %1323 = vst [vmem:[%s232 + $0x70] sm:$0xff] %v1243
        %1324 = vst [vmem:[%s232 + $0x78] sm:$0xff] %v1244
        %1325 = vst [vmem:[%s232 + $0x80] sm:$0xff] %v1245
        %1326 = vst [vmem:[%s232 + $0x88] sm:$0xff] %v1246
        %1327 = vst [vmem:[%s232 + $0x90] sm:$0xff] %v1247
        %1328 = vst [vmem:[%s232 + $0x98] sm:$0xff] %v1248
        %1329 = vst [vmem:[%s232 + $0xa0] sm:$0xff] %v1249
        %1330 = vst [vmem:[%s232 + $0xa8] sm:$0xff] %v1250
        %1331 = vst [vmem:[%s232 + $0xb0] sm:$0xff] %v1251
        %1332 = vst [vmem:[%s232 + $0xb8] sm:$0xff] %v1252
        %1333 = vst [vmem:[%s232 + $0xc0] sm:$0xff] %v1253
        %1334 = vst [vmem:[%s232 + $0xc8] sm:$0xff] %v1254
        %1335 = vst [vmem:[%s232 + $0xd0] sm:$0xff] %v1255
        %1336 = vst [vmem:[%s232 + $0xd8] sm:$0xff] %v1256
        %1337 = vst [vmem:[%s232 + $0xe0] sm:$0xff] %v1257
        %1338 = vst [vmem:[%s232 + $0xe8] sm:$0xff] %v1258
        %1339 = vst [vmem:[%s232 + $0xf0] sm:$0xff] %v1259
        %1340 = vst [vmem:[%s232 + $0xf8] sm:$0xff] %v1260
        %1341 = vst [vmem:[%s232 + $0x100] sm:$0xff] %v1261
        %1342 = vst [vmem:[%s232 + $0x108] sm:$0xff] %v1262
        %1343 = vst [vmem:[%s232 + $0x110] sm:$0xff] %v1263
        %1344 = vst [vmem:[%s232 + $0x118] sm:$0xff] %v1264
        %1345 = vst [vmem:[%s232 + $0x120] sm:$0xff] %v1265
        %1346 = vst [vmem:[%s232 + $0x128] sm:$0xff] %v1266
        %1347 = vst [vmem:[%s232 + $0x130] sm:$0xff] %v1267
        %1348 = vst [vmem:[%s232 + $0x138] sm:$0xff] %v1268
        %1349 = vst [vmem:[%s232 + $0x140] sm:$0xff] %v1269
        %1350 = vst [vmem:[%s232 + $0x148] sm:$0xff] %v1270
        %1351 = vst [vmem:[%s232 + $0x150] sm:$0xff] %v1271
        %1352 = vst [vmem:[%s232 + $0x158] sm:$0xff] %v1272
        %1353 = vst [vmem:[%s232 + $0x160] sm:$0xff] %v1273
        %1354 = vst [vmem:[%s232 + $0x168] sm:$0xff] %v1274
        %1355 = vst [vmem:[%s232 + $0x170] sm:$0xff] %v1275
        %1356 = vst [vmem:[%s232 + $0x178] sm:$0xff] %v1276
        %1357 = vst [vmem:[%s232 + $0x180] sm:$0xff] %v1277
        %1358 = vst [vmem:[%s232 + $0x188] sm:$0xff] %v1278
        %1359 = vst [vmem:[%s232 + $0x190] sm:$0xff] %v1279
        %1360 = vst [vmem:[%s232 + $0x198] sm:$0xff] %v1280
        %1361 = vst [vmem:[%s232 + $0x1a0] sm:$0xff] %v1281
        %1362 = vst [vmem:[%s232 + $0x1a8] sm:$0xff] %v1282
        %1363 = vst [vmem:[%s232 + $0x1b0] sm:$0xff] %v1283
        %1364 = vst [vmem:[%s232 + $0x1b8] sm:$0xff] %v1284
        %1365 = vst [vmem:[%s232 + $0x1c0] sm:$0xff] %v1285
        %1366 = vst [vmem:[%s232 + $0x1c8] sm:$0xff] %v1286
        %1367 = vst [vmem:[%s232 + $0x1d0] sm:$0xff] %v1287
        %1368 = vst [vmem:[%s232 + $0x1d8] sm:$0xff] %v1288
        %1369 = vst [vmem:[%s232 + $0x1e0] sm:$0xff] %v1289
        %1370 = vst [vmem:[%s232 + $0x1e8] sm:$0xff] %v1290
        %1371 = vst [vmem:[%s232 + $0x1f0] sm:$0xff] %v1291
        %1372 = vst [vmem:[%s232 + $0x1f8] sm:$0xff] %v1292
        %1373 = vst [vmem:[%s232 + $0x200] sm:$0xff] %v1293
        %1374 = vst [vmem:[%s232 + $0x208] sm:$0xff] %v1294
        %1375 = vst [vmem:[%s232 + $0x210] sm:$0xff] %v1295
        %1376 = vst [vmem:[%s232 + $0x218] sm:$0xff] %v1296
        %1377 = vst [vmem:[%s232 + $0x220] sm:$0xff] %v1297
        %1378 = vst [vmem:[%s232 + $0x228] sm:$0xff] %v1298
        %1379 = vst [vmem:[%s232 + $0x230] sm:$0xff] %v1299
        %1380 = vst [vmem:[%s232 + $0x238] sm:$0xff] %v1300
        %1381 = vst [vmem:[%s232 + $0x240] sm:$0xff] %v1301
        %1382 = vst [vmem:[%s232 + $0x248] sm:$0xff] %v1302
        %1383 = vst [vmem:[%s232 + $0x250] sm:$0xff] %v1303
        %1384 = vst [vmem:[%s232 + $0x258] sm:$0xff] %v1304
        %1385 = vst [vmem:[%s232 + $0x260] sm:$0xff] %v1305
        %1386 = vst [vmem:[%s232 + $0x268] sm:$0xff] %v1306
        %1387 = vst [vmem:[%s232 + $0x270] sm:$0xff] %v1307
        %1388 = vst [vmem:[%s232 + $0x278] sm:$0xff] %v1308
        %s1389 = sand.u32 %s107, 1
        %s1390 = scalar_lea.sflag [#allocation4], %s1389
        %s1391 = sand.u32 %s107, 1
        %s1392 = smul.addr %s1391, 640
        %s1393 = scalar_lea.vmem [#allocation7], %s1392
        // Predicated region
        $region41: #{tpu_custom_call.1} parent=27 // pred_check
          %p1394 = pneg %p117
        $region42: #{tpu_custom_call.1} parent=27 // pred_check_branch
          %1396 = sbr.rel (%p1394) target = $region44
        $region43: #{tpu_custom_call.1} parent=27 // pred_region
          %s1397 = smul.u32 40, %s27
          %s1398 = smul.u32 2, %s28
          %s1400 = ssub.s32 10240, 10240
          %1401 = vsyncadd %s1390, %s1400
          %s1402 = smul.addr %s1397, 2
          %s1403 = sadd.s32 %s1398, %s1402
          %s1404 = smul.addr %s1403, 128
          %s1405 = scalar_lea.hbm %s2, %s1404
          %s1406 = sshll.u32 %s1393, 4
          %s1407 = int_to_ptr.vmem [resolvable:$true] %s1406
          %1412 = dma.vmem_to_hbm [thread:$0]  %s1407, 10240, %s1405, %s1390, 256, 256, 16
        $region44: #{tpu_custom_call.1} parent=27 // pred_fallthru
          _
      $region28: #{tpu_custom_call.1} parent=5 // pred_fallthru
        _
      %p1413 = scmp.le.s32.totalorder 2, %s17
      // Predicated region
      $region45: #{tpu_custom_call.1} parent=5 // pred_check
        %p1414 = pneg %p1413
      $region46: #{tpu_custom_call.1} parent=5 // pred_check_branch
        %1416 = sbr.rel (%p1414) target = $region48
      $region47: #{tpu_custom_call.1} parent=5 // pred_region
        %s1417 = ssub.s32 %s17, 2
        // Predicated region
        $region49: #{tpu_custom_call.1} parent=47 // pred_check
          %p1418 = pneg %p123
        $region50: #{tpu_custom_call.1} parent=47 // pred_check_branch
          %1420 = sbr.rel (%p1418) target = $region52
        $region51: #{tpu_custom_call.1} parent=47 // pred_region
          %s1421 = sand.u32 %s108, 1
          %s1422 = scalar_lea.sflag [#allocation4], %s1421
          %s1423 = sand.u32 %s108, 1
          %s1424 = smul.addr %s1423, 640
          %s1425 = scalar_lea.vmem [#allocation7], %s1424
          %1426 = dma.done %s1422, 10240
        $region52: #{tpu_custom_call.1} parent=47 // pred_fallthru
          _
      $region48: #{tpu_custom_call.1} parent=5 // pred_fallthru
        _
    $region6: #{tpu_custom_call.1} parent=1 // loop_footer
      %s21 = sadd.s32 1, %s17
    $region7: #{tpu_custom_call.1} parent=1 // loop_footer_branch
      %16 = sbr.rel target = $region3
    $region8: #{tpu_custom_call.1} parent=1 // loop_exit
      _
    %1427 = vsyncpa [#allocation3], 1
    %s1428 = scalar_lea.sflag [#allocation3], 1
    %1429 = vsyncpa %s1428, 1
    %1430 = vsyncpa [#allocation6], 1
    %s1431 = scalar_lea.sflag [#allocation6], 1
    %1432 = vsyncpa %s1431, 1
    %1433 = vsyncpa [#allocation4], 1
    %s1434 = scalar_lea.sflag [#allocation4], 1
    %1435 = vsyncpa %s1434, 1

</llo_original>
